<compile_context>
chip_gen: v5e
topology: v5e:2x2
jax: 0.10.0
libtpu: 0.0.40
codegen_flags: <defaults>
</compile_context>

<pallas_src>
import jax
import jax.numpy as jnp
import numpy as np
from jax import lax
from jax.experimental import pallas as pl
from jax.experimental.pallas import tpu as pltpu


_VMEM_LIMIT = 32 * 1024 * 1024  # explicit scoped-VMEM cap (safe on v5e/v6e/v7x)


# --------------------------------------------------------------------------
# tiling helpers
# --------------------------------------------------------------------------
def _pick_rows(n, cap=16):
    """Largest divisor of n that is <= cap (row-tile size)."""
    for d in range(min(n, cap), 0, -1):
        if n % d == 0:
            return d
    return 1


def _pick_tile_m(hw, cap=2048):
    """Largest divisor of hw that is a multiple of 8 and <= cap (else full)."""
    best = 0
    for d in range(1, min(hw, cap) + 1):
        if hw % d == 0 and d % 8 == 0:
            best = d
    return best if best > 0 else hw


# --------------------------------------------------------------------------
# first conv (Cin = 3): fold the 9 taps into the contraction dim (K = 27)
# --------------------------------------------------------------------------
def _mm_bias_relu_kernel(x_ref, w_ref, b_ref, o_ref):
    acc = jnp.dot(x_ref[...], w_ref[...], preferred_element_type=jnp.float32)
    acc = acc + b_ref[...]                       # f32 bias
    o_ref[...] = jnp.maximum(acc, 0.0).astype(o_ref.dtype)


def _conv3x3_small_cin(x_nhwc, wmat, bmat, out_dtype=jnp.bfloat16):
    """3x3 conv + bias + ReLU for tiny Cin (VGG conv1_1, Cin=3).

    The wrapper builds a 27-channel im2col (cheap for Cin=3) so the MXU sees a
    single K=27 contraction per tile instead of nine K=3 matmuls."""
    N, H, W, Cin = x_nhwc.shape
    K, Cout = wmat.shape                         # K = 9 * Cin
    xp = jnp.pad(x_nhwc.astype(jnp.bfloat16), ((0, 0), (1, 1), (1, 1), (0, 0)))
    cols = jnp.concatenate(
        [xp[:, dy:dy + H, dx:dx + W, :] for dy in range(3) for dx in range(3)],
        axis=-1).reshape(N, H * W, K)

    tile_m = _pick_tile_m(H * W)
    grid = (N, (H * W) // tile_m)
    out = pl.pallas_call(
        _mm_bias_relu_kernel,
        out_shape=jax.ShapeDtypeStruct((N, H * W, Cout), out_dtype),
        grid=grid,
        in_specs=[
            pl.BlockSpec((None, tile_m, K), lambda n, m: (n, m, 0)),
            pl.BlockSpec((K, Cout), lambda n, m: (0, 0)),
            pl.BlockSpec((1, Cout), lambda n, m: (0, 0)),
        ],
        out_specs=pl.BlockSpec((None, tile_m, Cout), lambda n, m: (n, m, 0)),
        compiler_params=pltpu.CompilerParams(
            dimension_semantics=("parallel", "parallel"),
            vmem_limit_bytes=_VMEM_LIMIT),
    )(cols, wmat, bmat)
    return out.reshape(N, H, W, Cout)


# --------------------------------------------------------------------------
# general conv 3x3 (Cin >= 64): halo row-tiles, manual double-buffered DMA
# --------------------------------------------------------------------------
def _make_conv_kernel(tile_h, W, Cin, Cout):
    def kernel(x_hbm, w_ref, b_ref, o_ref, xbuf, sem):
        # x_hbm : (N, H+2, W+2, Cin)  bf16, zero-padded, stays in HBM (ANY)
        # w_ref : (9, Cin, Cout)      bf16
        # b_ref : (1, Cout)           f32
        # o_ref : (tile_h, W, Cout)   bf16 (batch dim squeezed)
        # xbuf  : (2, tile_h+2, W+2, Cin) bf16 VMEM double buffer
        # sem   : DMA semaphores, shape (2,)
        n = pl.program_id(0)
        i = pl.program_id(1)
        num_i = pl.num_programs(1)
        slot = lax.rem(i, 2)

        def tile_copy(row_tile, dst_slot):
            return pltpu.make_async_copy(
                x_hbm.at[n, pl.ds(row_tile * tile_h, tile_h + 2), :, :],
                xbuf.at[dst_slot],
                sem.at[dst_slot])

        # Prime the pipeline on the first row-tile of this image.
        @pl.when(i == 0)
        def _():
            tile_copy(0, 0).start()

        # Wait for the current tile (started above or prefetched last step).
        tile_copy(i, slot).wait()

        # Prefetch next row-tile of the same image; overlaps with the compute.
        @pl.when(i + 1 < num_i)
        def _():
            tile_copy(i + 1, 1 - slot).start()

        bias = b_ref[...]                                    # (1, Cout) f32

        def row_body(y, carry):
            acc = jnp.zeros((W, Cout), jnp.float32)
            for k in range(9):                               # 9 MXU matmuls / row
                dy, dx = k // 3, k % 3
                lhs = xbuf[slot, y + dy, pl.ds(dx, W), :]    # (W, Cin) bf16 tap
                acc = acc + jnp.dot(lhs, w_ref[k],
                                    preferred_element_type=jnp.float32)
            acc = acc + bias                                 # f32 epilogue
            o_ref[y, :, :] = jnp.maximum(acc, 0.0).astype(o_ref.dtype)
            return carry

        lax.fori_loop(0, tile_h, row_body, 0)

    return kernel


def _conv3x3_halo(x_nhwc, wmat, bmat, out_dtype=jnp.bfloat16):
    """3x3 conv (stride 1, pad 1) + bias + ReLU, bf16 MXU / f32 accumulate."""
    N, H, W, Cin = x_nhwc.shape
    Cout = wmat.shape[-1]
    xp = jnp.pad(x_nhwc.astype(jnp.bfloat16), ((0, 0), (1, 1), (1, 1), (0, 0)))

    tile_h = _pick_rows(H, cap=16)
    n_h = H // tile_h
    kernel = _make_conv_kernel(tile_h, W, Cin, Cout)

    return pl.pallas_call(
        kernel,
        out_shape=jax.ShapeDtypeStruct((N, H, W, Cout), out_dtype),
        grid=(N, n_h),
        in_specs=[
            pl.BlockSpec(memory_space=pl.ANY),                      # padded act (HBM)
            pl.BlockSpec((9, Cin, Cout), lambda n, i: (0, 0, 0)),   # weights
            pl.BlockSpec((1, Cout), lambda n, i: (0, 0)),           # bias
        ],
        out_specs=pl.BlockSpec((None, tile_h, W, Cout), lambda n, i: (n, i, 0, 0)),
        scratch_shapes=[
            pltpu.VMEM((2, tile_h + 2, W + 2, Cin), jnp.bfloat16),
            pltpu.SemaphoreType.DMA((2,)),
        ],
        compiler_params=pltpu.CompilerParams(
            # batch axis parallel (megacore); row-tile axis stays sequential
            # because of the cross-step DMA prefetch into the shared scratch.
            dimension_semantics=("parallel", "arbitrary"),
            vmem_limit_bytes=_VMEM_LIMIT),
    )(xp, wmat, bmat)


# --------------------------------------------------------------------------
# maxpool 2x2, stride 2 (strided in-kernel reads, no tap materialization)
# --------------------------------------------------------------------------
def _maxpool2x2_kernel(x_ref, o_ref):
    tho, wo, _ = o_ref.shape
    x00 = x_ref[pl.ds(0, tho, 2), pl.ds(0, wo, 2), :].astype(jnp.float32)
    x01 = x_ref[pl.ds(0, tho, 2), pl.ds(1, wo, 2), :].astype(jnp.float32)
    x10 = x_ref[pl.ds(1, tho, 2), pl.ds(0, wo, 2), :].astype(jnp.float32)
    x11 = x_ref[pl.ds(1, tho, 2), pl.ds(1, wo, 2), :].astype(jnp.float32)
    m = jnp.maximum(jnp.maximum(x00, x01), jnp.maximum(x10, x11))
    o_ref[...] = m.astype(o_ref.dtype)


def maxpool2x2(x_nhwc):
    # TODO(synk): assumes even H/W (true for all VGG feature maps); odd sizes
    # would need the same floor semantics as reduce_window 'VALID'.
    N, H, W, C = x_nhwc.shape
    Ho, Wo = H // 2, W // 2
    tile_ho = _pick_rows(Ho, cap=16)
    grid = (N, Ho // tile_ho)
    return pl.pallas_call(
        _maxpool2x2_kernel,
        out_shape=jax.ShapeDtypeStruct((N, Ho, Wo, C), x_nhwc.dtype),
        grid=grid,
        in_specs=[pl.BlockSpec((None, 2 * tile_ho, W, C), lambda n, i: (n, i, 0, 0))],
        out_specs=pl.BlockSpec((None, tile_ho, Wo, C), lambda n, i: (n, i, 0, 0)),
        compiler_params=pltpu.CompilerParams(
            dimension_semantics=("parallel", "parallel"),
            vmem_limit_bytes=_VMEM_LIMIT),
    )(x_nhwc)


# --------------------------------------------------------------------------
# Vgg16 module (features up to relu3_3)
# --------------------------------------------------------------------------
class Vgg16:
    """Pallas port of torchvision-VGG16 features[0:16] (relu1_2/relu2_2/relu3_3)."""

    # (Cout, Cin) of the 7 conv layers in features[0..15]
    _CFG = [(64, 3), (64, 64),                    # to_relu_1_2
            (128, 64), (128, 128),                # to_relu_2_2 (after maxpool)
            (256, 128), (256, 256), (256, 256)]   # to_relu_3_3 (after maxpool)

    def __init__(self, key):
        # TODO(synk): torchvision pretrained weights cannot be loaded here;
        # deterministic He-style init is used instead (shapes are identical).
        self.params = []
        for cout, cin in self._CFG:
            key, wk, bk = jax.random.split(key, 3)
            w = jax.random.normal(wk, (cout, cin, 3, 3), jnp.float32) * jnp.sqrt(2.0 / (cin * 9))
            b = jax.random.normal(bk, (cout,), jnp.float32) * 0.01
            self.params.append((w, b))

        # kernel-format weights: bf16 MXU operands, f32 bias
        self._kparams = []
        for idx, (w, b) in enumerate(self.params):
            cout, cin = w.shape[0], w.shape[1]
            wt = jnp.transpose(w, (2, 3, 1, 0))            # (ky, kx, Cin, Cout)
            if idx == 0:
                wmat = wt.reshape(9 * cin, cout)           # folded K for Cin=3
            else:
                wmat = wt.reshape(9, cin, cout)
            self._kparams.append((wmat.astype(jnp.bfloat16),
                                  b.reshape(1, cout).astype(jnp.float32)))

    def __call__(self, x_nchw):
        # NCHW (PyTorch convention) -> NHWC so the channel dim sits on the lanes
        h = jnp.transpose(x_nchw, (0, 2, 3, 1)).astype(jnp.bfloat16)
        kp = self._kparams

        # to_relu_1_2: conv-relu, conv-relu
        h = _conv3x3_small_cin(h, *kp[0])
        h = _conv3x3_halo(h, *kp[1])
        h_relu_1_2 = h
        # to_relu_2_2: maxpool, conv-relu, conv-relu
        h = maxpool2x2(h)
        h = _conv3x3_halo(h, *kp[2])
        h = _conv3x3_halo(h, *kp[3])
        h_relu_2_2 = h
        # to_relu_3_3: maxpool, conv-relu, conv-relu, conv-relu
        h = maxpool2x2(h)
        h = _conv3x3_halo(h, *kp[4])
        h = _conv3x3_halo(h, *kp[5])
        h = _conv3x3_halo(h, *kp[6])
        h_relu_3_3 = h

        to_nchw = lambda a: jnp.transpose(a.astype(jnp.float32), (0, 3, 1, 2))
        return (to_nchw(h_relu_1_2), to_nchw(h_relu_2_2), to_nchw(h_relu_3_3))


# --------------------------------------------------------------------------
# plain-JAX reference (mirrors the bf16 quantization, for correctness check)
# --------------------------------------------------------------------------
def _ref_forward(x_nchw, params):
    def conv(x, w, b):
        y = jax.lax.conv_general_dilated(
            x.astype(jnp.bfloat16), w.astype(jnp.bfloat16), (1, 1), ((1, 1), (1, 1)),
            dimension_numbers=("NCHW", "OIHW", "NCHW"),
            preferred_element_type=jnp.float32)
        y = jnp.maximum(y + b[None, :, None, None].astype(jnp.float32), 0.0)
        return y.astype(jnp.bfloat16)

    def pool(x):
        y = jax.lax.reduce_window(x.astype(jnp.float32), -jnp.inf, jax.lax.max,
                                  (1, 1, 2, 2), (1, 1, 2, 2), "VALID")
        return y.astype(jnp.bfloat16)

    h = x_nchw.astype(jnp.bfloat16)
    h = conv(h, *params[0]); h = conv(h, *params[1]); r1 = h
    h = pool(h)
    h = conv(h, *params[2]); h = conv(h, *params[3]); r2 = h
    h = pool(h)
    h = conv(h, *params[4]); h = conv(h, *params[5]); h = conv(h, *params[6]); r3 = h
    f32 = lambda a: a.astype(jnp.float32)
    return f32(r1), f32(r2), f32(r3)


if __name__ == "__main__":
    key = jax.random.PRNGKey(0)
    key, xk, mk = jax.random.split(key, 3)

    # VGG requires 3 input channels; small spatial/batch for the test
    x = jax.random.normal(xk, (2, 3, 32, 32), jnp.float32)   # NCHW like PyTorch

    model = Vgg16(mk)
    outs = jax.block_until_ready(model(x))
    refs = jax.block_until_ready(_ref_forward(x, model.params))

    expected_shapes = [(2, 64, 32, 32), (2, 128, 16, 16), (2, 256, 8, 8)]
    for o, r, s in zip(outs, refs, expected_shapes):
        assert o.shape == s and o.dtype == jnp.float32, (o.shape, o.dtype)
        np.testing.assert_allclose(np.asarray(o), np.asarray(r),
                                   rtol=3e-2, atol=3e-2)

    print("KERNEL_OK")
</pallas_src>

<mosaic_0001>
module attributes {stable_mosaic.version = 11 : i64} {
  func.func @_mm_bias_relu_kernel(%arg0: i32, %arg1: i32, %arg2: memref<1x1024x27xbf16, #tpu.memory_space<vmem>>, %arg3: memref<27x64xbf16, #tpu.memory_space<vmem>>, %arg4: memref<1x64xf32, #tpu.memory_space<vmem>>, %arg5: memref<1x1024x64xbf16, #tpu.memory_space<vmem>>) attributes {dimension_semantics = [#tpu.dimension_semantics<parallel>, #tpu.dimension_semantics<parallel>], iteration_bounds = array<i64: 2, 1>, scalar_prefetch = 0 : i64, scratch_operands = 0 : i64, tpu.core_type = #tpu.core_type<tc>, window_params = [{transform_indices = @transform_0, window_bounds = array<i64: 1, 1024, 27>}, {pipeline_mode = #tpu.pipeline_mode<synchronous>, transform_indices = @transform_1, window_bounds = array<i64: 27, 64>}, {pipeline_mode = #tpu.pipeline_mode<synchronous>, transform_indices = @transform_2, window_bounds = array<i64: 1, 64>}, {transform_indices = @transform_3, window_bounds = array<i64: 1, 1024, 64>}]} {
    %c0 = arith.constant 0 : index
    %c0_0 = arith.constant 0 : index
    %c0_1 = arith.constant 0 : index
    %0 = vector.load %arg2[%c0, %c0_0, %c0_1] : memref<1x1024x27xbf16, #tpu.memory_space<vmem>>, vector<1x1024x27xbf16>
    %1 = vector.shape_cast %0 : vector<1x1024x27xbf16> to vector<1024x27xbf16>
    %c0_2 = arith.constant 0 : index
    %c0_3 = arith.constant 0 : index
    %2 = vector.load %arg3[%c0_2, %c0_3] : memref<27x64xbf16, #tpu.memory_space<vmem>>, vector<27x64xbf16>
    %cst = arith.constant dense<0.000000e+00> : vector<1024x64xf32>
    %3 = tpu.matmul %1, %2, %cst {dimension_numbers = #tpu.dot_dimension_numbers<[1], [0], [0], [1], [0, 0, 1, 1], [], []>} : vector<1024x27xbf16>, vector<27x64xbf16>, vector<1024x64xf32> -> vector<1024x64xf32>
    %c0_4 = arith.constant 0 : index
    %c0_5 = arith.constant 0 : index
    %4 = vector.load %arg4[%c0_4, %c0_5] : memref<1x64xf32, #tpu.memory_space<vmem>>, vector<1x64xf32>
    %5 = vector.broadcast %4 : vector<1x64xf32> to vector<1024x64xf32>
    %6 = arith.addf %3, %5 : vector<1024x64xf32>
    %cst_6 = arith.constant 0.000000e+00 : f32
    %7 = vector.broadcast %cst_6 : f32 to vector<1024x64xf32>
    %8 = arith.maximumf %6, %7 : vector<1024x64xf32>
    %9 = arith.truncf %8 : vector<1024x64xf32> to vector<1024x64xbf16>
    %c0_7 = arith.constant 0 : index
    %c0_8 = arith.constant 0 : index
    %c0_9 = arith.constant 0 : index
    %10 = vector.load %arg5[%c0_7, %c0_8, %c0_9] : memref<1x1024x64xbf16, #tpu.memory_space<vmem>>, vector<1x1024x64xbf16>
    %11 = vector.shape_cast %10 : vector<1x1024x64xbf16> to vector<1024x64xbf16>
    %12 = vector.shape_cast %9 : vector<1024x64xbf16> to vector<1x1024x64xbf16>
    tpu.vector_store %arg5[%c0_7, %c0_8, %c0_9], %12 {strides = array<i32>} : memref<1x1024x64xbf16, #tpu.memory_space<vmem>>, vector<1x1024x64xbf16>,
    return
  }
  func.func @transform_0(%arg0: i32, %arg1: i32) -> (i32, i32, i32) {
    %c0_i32 = arith.constant 0 : i32
    %c0_i32_0 = arith.constant 0 : i32
    return %arg0, %arg1, %c0_i32 : i32, i32, i32
  }
  func.func @transform_1(%arg0: i32, %arg1: i32) -> (i32, i32) {
    %c0_i32 = arith.constant 0 : i32
    %c0_i32_0 = arith.constant 0 : i32
    %c0_i32_1 = arith.constant 0 : i32
    return %c0_i32, %c0_i32_0 : i32, i32
  }
  func.func @transform_2(%arg0: i32, %arg1: i32) -> (i32, i32) {
    %c0_i32 = arith.constant 0 : i32
    %c0_i32_0 = arith.constant 0 : i32
    %c0_i32_1 = arith.constant 0 : i32
    return %c0_i32, %c0_i32_0 : i32, i32
  }
  func.func @transform_3(%arg0: i32, %arg1: i32) -> (i32, i32, i32) {
    %c0_i32 = arith.constant 0 : i32
    %c0_i32_0 = arith.constant 0 : i32
    return %arg0, %arg1, %c0_i32 : i32, i32, i32
  }
}

</mosaic_0001>

<llo_original>
// kernel: tpu_custom_call.1
$region0: #{tpu_custom_call.1}
  #allocation0 [shape = 'u32[]', space=smem, size = 0x4, offset = 0x4, fixed_abs, tag = 'smem constant byte address 0x4 - core index']
  #allocation1 [shape = 'u32[72,128]{1,0:T(1,128)}', space=vmem, size = 0x9000, scoped, tag = 'internal scratch']
  %s0 = inlined_call_operand.vmem [shape: bf16[2,1024,27], index: 0, kind: input, shape index: {}]
  %s1 = inlined_call_operand.vmem [shape: bf16[27,64], index: 1, kind: input, shape index: {}]
  %s2 = inlined_call_operand.vmem [shape: f32[1,64], index: 2, kind: input, shape index: {}]
  %s3 = inlined_call_operand.vmem [shape: bf16[2,1024,64], index: 3, kind: output, shape index: {}]
  %s4 = sld [smem:[#allocation0]]
  $region45: #{tpu_custom_call.1} parent=0
    _
  %s6 = ssub.s32 1, %s4
  %s7 = scalar_select 0, %s6, %s4
  loop: start=0, step=1, limit=4
  $region2: #{tpu_custom_call.1} parent=0 // loop_pre_header
    _
  $region3: #{tpu_custom_call.1} parent=0 // loop_header
    %s9 = sphi 0, %s13
    %p10 = scmp.ge.s32.totalorder %s9, 4
    %s16 = sphi 0, %s28
    %s17 = sphi 0, %s24
    %s18 = sphi 0, %s16
    %s19 = sphi 0, %s17
    %s20 = sphi 0, %s18
    %s21 = sphi 0, %s19
    %s33 = sphi 0, %s35
    %s36 = sphi 0, %s33
    %s37 = sphi 0, %s36
    %s53 = sphi 0, %s37
    %s57 = sphi 0, %s57
    %s59 = sphi 0, %s57
    %s60 = sphi 0, %s59
    %s74 = sphi 0, %s60
    %s78 = sphi 0, %s78
    %s80 = sphi 0, %s78
    %s81 = sphi 0, %s80
    %s95 = sphi 0, %s81
    %s103 = sphi 0, %s105
    %s106 = sphi 0, %s103
    %s107 = sphi 0, %s106
    %s123 = sphi 0, %s107
  $region4: #{tpu_custom_call.1} parent=0 // loop_header_branch
    %12 = sbr.rel (%p10) target = $region8
  $region5: #{tpu_custom_call.1} parent=0 // loop_body
    %s14 = ssub.s32 %s9, 1
    %s15 = ssub.s32 %s9, 2
    %s22 = sadd.s32 1, %s17
    %p23 = scmp.ge.s32.totalorder %s22, 1
    %s24 = scalar_select %p23, 0, %s22
    %s25 = sadd.s32 1, %s16
    %s26 = scalar_select %p23, %s25, %s16
    %p27 = scmp.ge.s32.totalorder %s26, 2
    %s28 = scalar_select %p27, 0, %s26
    %s29 = ssub.s32 %s16, %s28
    %s30 = ssub.s32 %s17, %s24
    %s31 = sor.u32 %s29, %s30
    %p32 = scmp.eq.s32.totalorder %s31, 0
    %s34 = sadd.s32 %s33, 1
    %s35 = scalar_select %p32, %s33, %s34
    %p38 = pneg %p32
    %p39 = scmp.eq.s32.totalorder %s9, 1
    %p40 = por %p38, %p39
    %p41 = scmp.ne.s32.totalorder %s33, %s36
    %p42 = scmp.eq.s32.totalorder %s9, 0
    %p43 = por %p41, %p42
    %p44 = scmp.ne.s32.totalorder %s33, %s36
    %p45 = scmp.eq.s32.totalorder %s14, 1
    %p46 = por %p44, %p45
    %p47 = scmp.ne.s32.totalorder %s36, %s37
    %p48 = scmp.eq.s32.totalorder %s14, 0
    %p49 = por %p47, %p48
    %p50 = scmp.ne.s32.totalorder %s36, %s37
    %p51 = scmp.eq.s32.totalorder %s15, 1
    %p52 = por %p50, %p51
    %p54 = scmp.ne.s32.totalorder %s37, %s53
    %p55 = scmp.eq.s32.totalorder %s15, 0
    %p56 = por %p54, %p55
    %s58 = sadd.s32 %s57, 1
    %p61 = scmp.eq.s32.totalorder %s9, 1
    %p62 = scmp.ne.s32.totalorder %s57, %s59
    %p63 = scmp.eq.s32.totalorder %s9, 0
    %p64 = por %p62, %p63
    %p65 = scmp.ne.s32.totalorder %s57, %s59
    %p66 = scmp.eq.s32.totalorder %s14, 1
    %p67 = por %p65, %p66
    %p68 = scmp.ne.s32.totalorder %s59, %s60
    %p69 = scmp.eq.s32.totalorder %s14, 0
    %p70 = por %p68, %p69
    %p71 = scmp.ne.s32.totalorder %s59, %s60
    %p72 = scmp.eq.s32.totalorder %s15, 1
    %p73 = por %p71, %p72
    %p75 = scmp.ne.s32.totalorder %s60, %s74
    %p76 = scmp.eq.s32.totalorder %s15, 0
    %p77 = por %p75, %p76
    %s79 = sadd.s32 %s78, 1
    %p82 = scmp.eq.s32.totalorder %s9, 1
    %p83 = scmp.ne.s32.totalorder %s78, %s80
    %p84 = scmp.eq.s32.totalorder %s9, 0
    %p85 = por %p83, %p84
    %p86 = scmp.ne.s32.totalorder %s78, %s80
    %p87 = scmp.eq.s32.totalorder %s14, 1
    %p88 = por %p86, %p87
    %p89 = scmp.ne.s32.totalorder %s80, %s81
    %p90 = scmp.eq.s32.totalorder %s14, 0
    %p91 = por %p89, %p90
    %p92 = scmp.ne.s32.totalorder %s80, %s81
    %p93 = scmp.eq.s32.totalorder %s15, 1
    %p94 = por %p92, %p93
    %p96 = scmp.ne.s32.totalorder %s81, %s95
    %p97 = scmp.eq.s32.totalorder %s15, 0
    %p98 = por %p96, %p97
    %s99 = ssub.s32 %s16, %s28
    %s100 = ssub.s32 %s17, %s24
    %s101 = sor.u32 %s99, %s100
    %p102 = scmp.eq.s32.totalorder %s101, 0
    %s104 = sadd.s32 %s103, 1
    %s105 = scalar_select %p102, %s103, %s104
    %p108 = pneg %p102
    %p109 = scmp.eq.s32.totalorder %s9, 1
    %p110 = por %p108, %p109
    %p111 = scmp.ne.s32.totalorder %s103, %s106
    %p112 = scmp.eq.s32.totalorder %s9, 0
    %p113 = por %p111, %p112
    %p114 = scmp.ne.s32.totalorder %s103, %s106
    %p115 = scmp.eq.s32.totalorder %s14, 1
    %p116 = por %p114, %p115
    %p117 = scmp.ne.s32.totalorder %s106, %s107
    %p118 = scmp.eq.s32.totalorder %s14, 0
    %p119 = por %p117, %p118
    %p120 = scmp.ne.s32.totalorder %s106, %s107
    %p121 = scmp.eq.s32.totalorder %s15, 1
    %p122 = por %p120, %p121
    %p124 = scmp.ne.s32.totalorder %s107, %s123
    %p125 = scmp.eq.s32.totalorder %s15, 0
    %p126 = por %p124, %p125
    %p127 = scmp.le.s32.totalorder 1, %s9
    %p128 = scmp.lt.s32.totalorder %s9, 3
    %p129 = pnand %p127, %p128
    %p130 = pneg %p129
    // Predicated region
    $region9: #{tpu_custom_call.1} parent=5 // pred_check
      _
    $region10: #{tpu_custom_call.1} parent=5 // pred_check_branch
      %132 = sbr.rel (%p129) target = $region12
    $region11: #{tpu_custom_call.1} parent=5 // pred_region
      %s133 = ssub.s32 %s9, 1
      // Predicated region
      $region13: #{tpu_custom_call.1} parent=11 // pred_check
        %p134 = pneg %p70
      $region14: #{tpu_custom_call.1} parent=11 // pred_check_branch
        %136 = sbr.rel (%p134) target = $region16
      $region15: #{tpu_custom_call.1} parent=11 // pred_region
        _
      $region16: #{tpu_custom_call.1} parent=11 // pred_fallthru
        _
      // Predicated region
      $region17: #{tpu_custom_call.1} parent=11 // pred_check
        %p137 = pneg %p91
      $region18: #{tpu_custom_call.1} parent=11 // pred_check_branch
        %139 = sbr.rel (%p137) target = $region20
      $region19: #{tpu_custom_call.1} parent=11 // pred_region
        _
      $region20: #{tpu_custom_call.1} parent=11 // pred_fallthru
        _
    $region12: #{tpu_custom_call.1} parent=5 // pred_fallthru
      _
    %p140 = scmp.lt.s32.totalorder %s9, 2
    // Predicated region
    $region21: #{tpu_custom_call.1} parent=5 // pred_check
      %p141 = pneg %p140
    $region22: #{tpu_custom_call.1} parent=5 // pred_check_branch
      %143 = sbr.rel (%p141) target = $region24
    $region23: #{tpu_custom_call.1} parent=5 // pred_region
      // Predicated region
      $region25: #{tpu_custom_call.1} parent=23 // pred_check
        %p144 = pneg %p43
      $region26: #{tpu_custom_call.1} parent=23 // pred_check_branch
        %146 = sbr.rel (%p144) target = $region28
      $region27: #{tpu_custom_call.1} parent=23 // pred_region
        %s147 = smul.u32 128, %s17
        %p148 = scmp.lt.s32.totalorder %s16, 1
        %s149 = scalar_select %p148, %s16, 1
        %p150 = scmp.lt.s32.totalorder %s147, 127
        %s151 = scalar_select %p150, %s147, 127
        %s152 = smul.addr %s149, 128
        %s153 = sadd.s32 %s151, %s152
        %s154 = smul.addr %s153, 4
        %s155 = scalar_lea.vmem %s0, %s154
        %s156 = smul.u32 128, %s17
      $region28: #{tpu_custom_call.1} parent=23 // pred_fallthru
        _
    $region24: #{tpu_custom_call.1} parent=5 // pred_fallthru
      _
    %p157 = scmp.le.s32.totalorder 1, %s9
    %p158 = scmp.lt.s32.totalorder %s9, 3
    %p159 = pnand %p157, %p158
    %p160 = pneg %p159
    // Predicated region
    $region29: #{tpu_custom_call.1} parent=5 // pred_check
      _
    $region30: #{tpu_custom_call.1} parent=5 // pred_check_branch
      %162 = sbr.rel (%p159) target = $region32
    $region31: #{tpu_custom_call.1} parent=5 // pred_region
      %s163 = ssub.s32 %s9, 1
      %s164 = smul.u32 128, %s19
      %p165 = scmp.lt.s32.totalorder %s18, 1
      %s166 = scalar_select %p165, %s18, 1
      %p167 = scmp.lt.s32.totalorder %s164, 127
      %s168 = scalar_select %p167, %s164, 127
      %s169 = smul.addr %s166, 128
      %s170 = sadd.s32 %s168, %s169
      %s171 = smul.addr %s170, 4
      %s172 = scalar_lea.vmem %s0, %s171
      %p173 = pneg %p49
      %p174 = pneg %p46
      %p175 = pneg %p70
      %p176 = pneg %p67
      %p177 = pneg %p91
      %p178 = pneg %p88
      %p179 = pneg %p119
      %p180 = pneg %p116
      %s181 = smul.u32 128, %s19
      %p182 = scmp.lt.s32.totalorder %s18, 1
      %s183 = scalar_select %p182, %s18, 1
      %p184 = scmp.lt.s32.totalorder %s181, 127
      %s185 = scalar_select %p184, %s181, 127
      %s186 = smul.addr %s183, 128
      %s187 = sadd.s32 %s185, %s186
      %s188 = smul.addr %s187, 4
      %s189 = scalar_lea.vmem %s3, %s188
      %s190 = smul.u32 128, %s19
      %p191 = scmp.lt.s32.totalorder %s18, 1
      %s192 = scalar_select %p191, %s18, 1
      %p193 = scmp.lt.s32.totalorder %s190, 127
      %s194 = scalar_select %p193, %s190, 127
      %s195 = smul.addr %s192, 128
      %s196 = sadd.s32 %s194, %s195
      %s197 = smul.addr %s196, 4
      %s198 = scalar_lea.vmem %s0, %s197
      %s199 = smul.u32 128, %s19
      %s200 = smul.u32 128, %s19
      %p201 = scmp.lt.s32.totalorder %s18, 1
      %s202 = scalar_select %p201, %s18, 1
      %p203 = scmp.lt.s32.totalorder %s200, 127
      %s204 = scalar_select %p203, %s200, 127
      %s205 = smul.addr %s202, 128
      %s206 = sadd.s32 %s204, %s205
      %s207 = smul.addr %s206, 4
      %s208 = scalar_lea.vmem %s3, %s207
      %s209 = smul.u32 128, %s19
      %v211 = vld [vmem:[%s198] sm:$0xf]
      %v212 = vld [vmem:[%s198 + $0x4] sm:$0xf]
      %v213 = vld [vmem:[%s198 + $0x8] sm:$0xf]
      %v214 = vld [vmem:[%s198 + $0xc] sm:$0xf]
      %v215 = vld [vmem:[%s198 + $0x10] sm:$0xf]
      %v216 = vld [vmem:[%s198 + $0x14] sm:$0xf]
      %v217 = vld [vmem:[%s198 + $0x18] sm:$0xf]
      %v218 = vld [vmem:[%s198 + $0x1c] sm:$0xf]
      %v219 = vld [vmem:[%s198 + $0x20] sm:$0xf]
      %v220 = vld [vmem:[%s198 + $0x24] sm:$0xf]
      %v221 = vld [vmem:[%s198 + $0x28] sm:$0xf]
      %v222 = vld [vmem:[%s198 + $0x2c] sm:$0xf]
      %v223 = vld [vmem:[%s198 + $0x30] sm:$0xf]
      %v224 = vld [vmem:[%s198 + $0x34] sm:$0xf]
      %v225 = vld [vmem:[%s198 + $0x38] sm:$0xf]
      %v226 = vld [vmem:[%s198 + $0x3c] sm:$0xf]
      %v227 = vld [vmem:[%s198 + $0x40] sm:$0xf]
      %v228 = vld [vmem:[%s198 + $0x44] sm:$0xf]
      %v229 = vld [vmem:[%s198 + $0x48] sm:$0xf]
      %v230 = vld [vmem:[%s198 + $0x4c] sm:$0xf]
      %v231 = vld [vmem:[%s198 + $0x50] sm:$0xf]
      %v232 = vld [vmem:[%s198 + $0x54] sm:$0xf]
      %v233 = vld [vmem:[%s198 + $0x58] sm:$0xf]
      %v234 = vld [vmem:[%s198 + $0x5c] sm:$0xf]
      %v235 = vld [vmem:[%s198 + $0x60] sm:$0xf]
      %v236 = vld [vmem:[%s198 + $0x64] sm:$0xf]
      %v237 = vld [vmem:[%s198 + $0x68] sm:$0xf]
      %v238 = vld [vmem:[%s198 + $0x6c] sm:$0xf]
      %v239 = vld [vmem:[%s198 + $0x70] sm:$0xf]
      %v240 = vld [vmem:[%s198 + $0x74] sm:$0xf]
      %v241 = vld [vmem:[%s198 + $0x78] sm:$0xf]
      %v242 = vld [vmem:[%s198 + $0x7c] sm:$0xf]
      %v243 = vld [vmem:[%s198 + $0x80] sm:$0xf]
      %v244 = vld [vmem:[%s198 + $0x84] sm:$0xf]
      %v245 = vld [vmem:[%s198 + $0x88] sm:$0xf]
      %v246 = vld [vmem:[%s198 + $0x8c] sm:$0xf]
      %v247 = vld [vmem:[%s198 + $0x90] sm:$0xf]
      %v248 = vld [vmem:[%s198 + $0x94] sm:$0xf]
      %v249 = vld [vmem:[%s198 + $0x98] sm:$0xf]
      %v250 = vld [vmem:[%s198 + $0x9c] sm:$0xf]
      %v251 = vld [vmem:[%s198 + $0xa0] sm:$0xf]
      %v252 = vld [vmem:[%s198 + $0xa4] sm:$0xf]
      %v253 = vld [vmem:[%s198 + $0xa8] sm:$0xf]
      %v254 = vld [vmem:[%s198 + $0xac] sm:$0xf]
      %v255 = vld [vmem:[%s198 + $0xb0] sm:$0xf]
      %v256 = vld [vmem:[%s198 + $0xb4] sm:$0xf]
      %v257 = vld [vmem:[%s198 + $0xb8] sm:$0xf]
      %v258 = vld [vmem:[%s198 + $0xbc] sm:$0xf]
      %v259 = vld [vmem:[%s198 + $0xc0] sm:$0xf]
      %v260 = vld [vmem:[%s198 + $0xc4] sm:$0xf]
      %v261 = vld [vmem:[%s198 + $0xc8] sm:$0xf]
      %v262 = vld [vmem:[%s198 + $0xcc] sm:$0xf]
      %v263 = vld [vmem:[%s198 + $0xd0] sm:$0xf]
      %v264 = vld [vmem:[%s198 + $0xd4] sm:$0xf]
      %v265 = vld [vmem:[%s198 + $0xd8] sm:$0xf]
      %v266 = vld [vmem:[%s198 + $0xdc] sm:$0xf]
      %v267 = vld [vmem:[%s198 + $0xe0] sm:$0xf]
      %v268 = vld [vmem:[%s198 + $0xe4] sm:$0xf]
      %v269 = vld [vmem:[%s198 + $0xe8] sm:$0xf]
      %v270 = vld [vmem:[%s198 + $0xec] sm:$0xf]
      %v271 = vld [vmem:[%s198 + $0xf0] sm:$0xf]
      %v272 = vld [vmem:[%s198 + $0xf4] sm:$0xf]
      %v273 = vld [vmem:[%s198 + $0xf8] sm:$0xf]
      %v274 = vld [vmem:[%s198 + $0xfc] sm:$0xf]
      %v275 = vld [vmem:[%s198 + $0x100] sm:$0xf]
      %v276 = vld [vmem:[%s198 + $0x104] sm:$0xf]
      %v277 = vld [vmem:[%s198 + $0x108] sm:$0xf]
      %v278 = vld [vmem:[%s198 + $0x10c] sm:$0xf]
      %v279 = vld [vmem:[%s198 + $0x110] sm:$0xf]
      %v280 = vld [vmem:[%s198 + $0x114] sm:$0xf]
      %v281 = vld [vmem:[%s198 + $0x118] sm:$0xf]
      %v282 = vld [vmem:[%s198 + $0x11c] sm:$0xf]
      %v283 = vld [vmem:[%s198 + $0x120] sm:$0xf]
      %v284 = vld [vmem:[%s198 + $0x124] sm:$0xf]
      %v285 = vld [vmem:[%s198 + $0x128] sm:$0xf]
      %v286 = vld [vmem:[%s198 + $0x12c] sm:$0xf]
      %v287 = vld [vmem:[%s198 + $0x130] sm:$0xf]
      %v288 = vld [vmem:[%s198 + $0x134] sm:$0xf]
      %v289 = vld [vmem:[%s198 + $0x138] sm:$0xf]
      %v290 = vld [vmem:[%s198 + $0x13c] sm:$0xf]
      %v291 = vld [vmem:[%s198 + $0x140] sm:$0xf]
      %v292 = vld [vmem:[%s198 + $0x144] sm:$0xf]
      %v293 = vld [vmem:[%s198 + $0x148] sm:$0xf]
      %v294 = vld [vmem:[%s198 + $0x14c] sm:$0xf]
      %v295 = vld [vmem:[%s198 + $0x150] sm:$0xf]
      %v296 = vld [vmem:[%s198 + $0x154] sm:$0xf]
      %v297 = vld [vmem:[%s198 + $0x158] sm:$0xf]
      %v298 = vld [vmem:[%s198 + $0x15c] sm:$0xf]
      %v299 = vld [vmem:[%s198 + $0x160] sm:$0xf]
      %v300 = vld [vmem:[%s198 + $0x164] sm:$0xf]
      %v301 = vld [vmem:[%s198 + $0x168] sm:$0xf]
      %v302 = vld [vmem:[%s198 + $0x16c] sm:$0xf]
      %v303 = vld [vmem:[%s198 + $0x170] sm:$0xf]
      %v304 = vld [vmem:[%s198 + $0x174] sm:$0xf]
      %v305 = vld [vmem:[%s198 + $0x178] sm:$0xf]
      %v306 = vld [vmem:[%s198 + $0x17c] sm:$0xf]
      %v307 = vld [vmem:[%s198 + $0x180] sm:$0xf]
      %v308 = vld [vmem:[%s198 + $0x184] sm:$0xf]
      %v309 = vld [vmem:[%s198 + $0x188] sm:$0xf]
      %v310 = vld [vmem:[%s198 + $0x18c] sm:$0xf]
      %v311 = vld [vmem:[%s198 + $0x190] sm:$0xf]
      %v312 = vld [vmem:[%s198 + $0x194] sm:$0xf]
      %v313 = vld [vmem:[%s198 + $0x198] sm:$0xf]
      %v314 = vld [vmem:[%s198 + $0x19c] sm:$0xf]
      %v315 = vld [vmem:[%s198 + $0x1a0] sm:$0xf]
      %v316 = vld [vmem:[%s198 + $0x1a4] sm:$0xf]
      %v317 = vld [vmem:[%s198 + $0x1a8] sm:$0xf]
      %v318 = vld [vmem:[%s198 + $0x1ac] sm:$0xf]
      %v319 = vld [vmem:[%s198 + $0x1b0] sm:$0xf]
      %v320 = vld [vmem:[%s198 + $0x1b4] sm:$0xf]
      %v321 = vld [vmem:[%s198 + $0x1b8] sm:$0xf]
      %v322 = vld [vmem:[%s198 + $0x1bc] sm:$0xf]
      %v323 = vld [vmem:[%s198 + $0x1c0] sm:$0xf]
      %v324 = vld [vmem:[%s198 + $0x1c4] sm:$0xf]
      %v325 = vld [vmem:[%s198 + $0x1c8] sm:$0xf]
      %v326 = vld [vmem:[%s198 + $0x1cc] sm:$0xf]
      %v327 = vld [vmem:[%s198 + $0x1d0] sm:$0xf]
      %v328 = vld [vmem:[%s198 + $0x1d4] sm:$0xf]
      %v329 = vld [vmem:[%s198 + $0x1d8] sm:$0xf]
      %v330 = vld [vmem:[%s198 + $0x1dc] sm:$0xf]
      %v331 = vld [vmem:[%s198 + $0x1e0] sm:$0xf]
      %v332 = vld [vmem:[%s198 + $0x1e4] sm:$0xf]
      %v333 = vld [vmem:[%s198 + $0x1e8] sm:$0xf]
      %v334 = vld [vmem:[%s198 + $0x1ec] sm:$0xf]
      %v335 = vld [vmem:[%s198 + $0x1f0] sm:$0xf]
      %v336 = vld [vmem:[%s198 + $0x1f4] sm:$0xf]
      %v337 = vld [vmem:[%s198 + $0x1f8] sm:$0xf]
      %v338 = vld [vmem:[%s198 + $0x1fc] sm:$0xf]
      %v339 = vld [vmem:[%s1] sm:$0xf]
      %v340 = vld [vmem:[%s1 + $0x4] sm:$0xf]
      %v341 = vld [vmem:[%s1 + $0x8] sm:$0xf]
      %v342 = vld [vmem:[%s1 + $0xc] sm:$0x3]
      %v343 = vld [vmem:[%s2] sm:$0x1]
      %v345 = vperm.slane %v343, 0
      %v475 = vunpack.c.l.b16 %v211
      %v476 = vunpack.c.l.b16 %v212
      %v477 = vunpack.c.l.b16 %v213
      %v478 = vunpack.c.l.b16 %v214
      %v479 = vunpack.c.l.b16 %v215
      %v480 = vunpack.c.l.b16 %v216
      %v481 = vunpack.c.l.b16 %v217
      %v482 = vunpack.c.l.b16 %v218
      %v483 = vunpack.c.l.b16 %v219
      %v484 = vunpack.c.l.b16 %v220
      %v485 = vunpack.c.l.b16 %v221
      %v486 = vunpack.c.l.b16 %v222
      %v487 = vunpack.c.l.b16 %v223
      %v488 = vunpack.c.l.b16 %v224
      %v489 = vunpack.c.l.b16 %v225
      %v490 = vunpack.c.l.b16 %v226
      %v491 = vunpack.c.l.b16 %v227
      %v492 = vunpack.c.l.b16 %v228
      %v493 = vunpack.c.l.b16 %v229
      %v494 = vunpack.c.l.b16 %v230
      %v495 = vunpack.c.l.b16 %v231
      %v496 = vunpack.c.l.b16 %v232
      %v497 = vunpack.c.l.b16 %v233
      %v498 = vunpack.c.l.b16 %v234
      %v499 = vunpack.c.l.b16 %v235
      %v500 = vunpack.c.l.b16 %v236
      %v501 = vunpack.c.l.b16 %v237
      %v502 = vunpack.c.l.b16 %v238
      %v503 = vunpack.c.l.b16 %v239
      %v504 = vunpack.c.l.b16 %v240
      %v505 = vunpack.c.l.b16 %v241
      %v506 = vunpack.c.l.b16 %v242
      %v507 = vunpack.c.l.b16 %v243
      %v508 = vunpack.c.l.b16 %v244
      %v509 = vunpack.c.l.b16 %v245
      %v510 = vunpack.c.l.b16 %v246
      %v511 = vunpack.c.l.b16 %v247
      %v512 = vunpack.c.l.b16 %v248
      %v513 = vunpack.c.l.b16 %v249
      %v514 = vunpack.c.l.b16 %v250
      %v515 = vunpack.c.l.b16 %v251
      %v516 = vunpack.c.l.b16 %v252
      %v517 = vunpack.c.l.b16 %v253
      %v518 = vunpack.c.l.b16 %v254
      %v519 = vunpack.c.l.b16 %v255
      %v520 = vunpack.c.l.b16 %v256
      %v521 = vunpack.c.l.b16 %v257
      %v522 = vunpack.c.l.b16 %v258
      %v523 = vunpack.c.l.b16 %v259
      %v524 = vunpack.c.l.b16 %v260
      %v525 = vunpack.c.l.b16 %v261
      %v526 = vunpack.c.l.b16 %v262
      %v527 = vunpack.c.l.b16 %v263
      %v528 = vunpack.c.l.b16 %v264
      %v529 = vunpack.c.l.b16 %v265
      %v530 = vunpack.c.l.b16 %v266
      %v531 = vunpack.c.l.b16 %v267
      %v532 = vunpack.c.l.b16 %v268
      %v533 = vunpack.c.l.b16 %v269
      %v534 = vunpack.c.l.b16 %v270
      %v535 = vunpack.c.l.b16 %v271
      %v536 = vunpack.c.l.b16 %v272
      %v537 = vunpack.c.l.b16 %v273
      %v538 = vunpack.c.l.b16 %v274
      %v539 = vunpack.c.l.b16 %v275
      %v540 = vunpack.c.l.b16 %v276
      %v541 = vunpack.c.l.b16 %v277
      %v542 = vunpack.c.l.b16 %v278
      %v543 = vunpack.c.l.b16 %v279
      %v544 = vunpack.c.l.b16 %v280
      %v545 = vunpack.c.l.b16 %v281
      %v546 = vunpack.c.l.b16 %v282
      %v547 = vunpack.c.l.b16 %v283
      %v548 = vunpack.c.l.b16 %v284
      %v549 = vunpack.c.l.b16 %v285
      %v550 = vunpack.c.l.b16 %v286
      %v551 = vunpack.c.l.b16 %v287
      %v552 = vunpack.c.l.b16 %v288
      %v553 = vunpack.c.l.b16 %v289
      %v554 = vunpack.c.l.b16 %v290
      %v555 = vunpack.c.l.b16 %v291
      %v556 = vunpack.c.l.b16 %v292
      %v557 = vunpack.c.l.b16 %v293
      %v558 = vunpack.c.l.b16 %v294
      %v559 = vunpack.c.l.b16 %v295
      %v560 = vunpack.c.l.b16 %v296
      %v561 = vunpack.c.l.b16 %v297
      %v562 = vunpack.c.l.b16 %v298
      %v563 = vunpack.c.l.b16 %v299
      %v564 = vunpack.c.l.b16 %v300
      %v565 = vunpack.c.l.b16 %v301
      %v566 = vunpack.c.l.b16 %v302
      %v567 = vunpack.c.l.b16 %v303
      %v568 = vunpack.c.l.b16 %v304
      %v569 = vunpack.c.l.b16 %v305
      %v570 = vunpack.c.l.b16 %v306
      %v571 = vunpack.c.l.b16 %v307
      %v572 = vunpack.c.l.b16 %v308
      %v573 = vunpack.c.l.b16 %v309
      %v574 = vunpack.c.l.b16 %v310
      %v575 = vunpack.c.l.b16 %v311
      %v576 = vunpack.c.l.b16 %v312
      %v577 = vunpack.c.l.b16 %v313
      %v578 = vunpack.c.l.b16 %v314
      %v579 = vunpack.c.l.b16 %v315
      %v580 = vunpack.c.l.b16 %v316
      %v581 = vunpack.c.l.b16 %v317
      %v582 = vunpack.c.l.b16 %v318
      %v583 = vunpack.c.l.b16 %v319
      %v584 = vunpack.c.l.b16 %v320
      %v585 = vunpack.c.l.b16 %v321
      %v586 = vunpack.c.l.b16 %v322
      %v587 = vunpack.c.l.b16 %v323
      %v588 = vunpack.c.l.b16 %v324
      %v589 = vunpack.c.l.b16 %v325
      %v590 = vunpack.c.l.b16 %v326
      %v591 = vunpack.c.l.b16 %v327
      %v592 = vunpack.c.l.b16 %v328
      %v593 = vunpack.c.l.b16 %v329
      %v594 = vunpack.c.l.b16 %v330
      %v595 = vunpack.c.l.b16 %v331
      %v596 = vunpack.c.l.b16 %v332
      %v597 = vunpack.c.l.b16 %v333
      %v598 = vunpack.c.l.b16 %v334
      %v599 = vunpack.c.l.b16 %v335
      %v600 = vunpack.c.l.b16 %v336
      %v601 = vunpack.c.l.b16 %v337
      %v602 = vunpack.c.l.b16 %v338
      %v603 = vpack.c.b16 %v476, %v475
      %v604 = vpack.c.b16 %v478, %v477
      %v605 = vpack.c.b16 %v480, %v479
      %v606 = vpack.c.b16 %v482, %v481
      %v607 = vpack.c.b16 %v484, %v483
      %v608 = vpack.c.b16 %v486, %v485
      %v609 = vpack.c.b16 %v488, %v487
      %v610 = vpack.c.b16 %v490, %v489
      %v611 = vpack.c.b16 %v492, %v491
      %v612 = vpack.c.b16 %v494, %v493
      %v613 = vpack.c.b16 %v496, %v495
      %v614 = vpack.c.b16 %v498, %v497
      %v615 = vpack.c.b16 %v500, %v499
      %v616 = vpack.c.b16 %v502, %v501
      %v617 = vpack.c.b16 %v504, %v503
      %v618 = vpack.c.b16 %v506, %v505
      %v619 = vpack.c.b16 %v508, %v507
      %v620 = vpack.c.b16 %v510, %v509
      %v621 = vpack.c.b16 %v512, %v511
      %v622 = vpack.c.b16 %v514, %v513
      %v623 = vpack.c.b16 %v516, %v515
      %v624 = vpack.c.b16 %v518, %v517
      %v625 = vpack.c.b16 %v520, %v519
      %v626 = vpack.c.b16 %v522, %v521
      %v627 = vpack.c.b16 %v524, %v523
      %v628 = vpack.c.b16 %v526, %v525
      %v629 = vpack.c.b16 %v528, %v527
      %v630 = vpack.c.b16 %v530, %v529
      %v631 = vpack.c.b16 %v532, %v531
      %v632 = vpack.c.b16 %v534, %v533
      %v633 = vpack.c.b16 %v536, %v535
      %v634 = vpack.c.b16 %v538, %v537
      %v635 = vpack.c.b16 %v540, %v539
      %v636 = vpack.c.b16 %v542, %v541
      %v637 = vpack.c.b16 %v544, %v543
      %v638 = vpack.c.b16 %v546, %v545
      %v639 = vpack.c.b16 %v548, %v547
      %v640 = vpack.c.b16 %v550, %v549
      %v641 = vpack.c.b16 %v552, %v551
      %v642 = vpack.c.b16 %v554, %v553
      %v643 = vpack.c.b16 %v556, %v555
      %v644 = vpack.c.b16 %v558, %v557
      %v645 = vpack.c.b16 %v560, %v559
      %v646 = vpack.c.b16 %v562, %v561
      %v647 = vpack.c.b16 %v564, %v563
      %v648 = vpack.c.b16 %v566, %v565
      %v649 = vpack.c.b16 %v568, %v567
      %v650 = vpack.c.b16 %v570, %v569
      %v651 = vpack.c.b16 %v572, %v571
      %v652 = vpack.c.b16 %v574, %v573
      %v653 = vpack.c.b16 %v576, %v575
      %v654 = vpack.c.b16 %v578, %v577
      %v655 = vpack.c.b16 %v580, %v579
      %v656 = vpack.c.b16 %v582, %v581
      %v657 = vpack.c.b16 %v584, %v583
      %v658 = vpack.c.b16 %v586, %v585
      %v659 = vpack.c.b16 %v588, %v587
      %v660 = vpack.c.b16 %v590, %v589
      %v661 = vpack.c.b16 %v592, %v591
      %v662 = vpack.c.b16 %v594, %v593
      %v663 = vpack.c.b16 %v596, %v595
      %v664 = vpack.c.b16 %v598, %v597
      %v665 = vpack.c.b16 %v600, %v599
      %v666 = vpack.c.b16 %v602, %v601
      %v671 = vunpack.c.l.b16 %v339
      %v672 = vunpack.c.l.b16 %v340
      %v673 = vunpack.c.l.b16 %v341
      %v674 = vunpack.c.l.b16 %v342
      %v675 = vpack.c.b16 %v672, %v671
      %v676 = vpack.c.b16 %v674, %v673
      %vm678 = vcmask 220160
      %v680 = vsel %vm678, %v603, 0
      %v683 = vsel %vm678, %v604, 0
      %v686 = vsel %vm678, %v605, 0
      %v689 = vsel %vm678, %v606, 0
      %v692 = vsel %vm678, %v607, 0
      %v695 = vsel %vm678, %v608, 0
      %v698 = vsel %vm678, %v609, 0
      %v701 = vsel %vm678, %v610, 0
      %v704 = vsel %vm678, %v611, 0
      %v707 = vsel %vm678, %v612, 0
      %v710 = vsel %vm678, %v613, 0
      %v713 = vsel %vm678, %v614, 0
      %v716 = vsel %vm678, %v615, 0
      %v719 = vsel %vm678, %v616, 0
      %v722 = vsel %vm678, %v617, 0
      %v725 = vsel %vm678, %v618, 0
      %v728 = vsel %vm678, %v619, 0
      %v731 = vsel %vm678, %v620, 0
      %v734 = vsel %vm678, %v621, 0
      %v737 = vsel %vm678, %v622, 0
      %v740 = vsel %vm678, %v623, 0
      %v743 = vsel %vm678, %v624, 0
      %v746 = vsel %vm678, %v625, 0
      %v749 = vsel %vm678, %v626, 0
      %v752 = vsel %vm678, %v627, 0
      %v755 = vsel %vm678, %v628, 0
      %v758 = vsel %vm678, %v629, 0
      %v761 = vsel %vm678, %v630, 0
      %v764 = vsel %vm678, %v631, 0
      %v767 = vsel %vm678, %v632, 0
      %v770 = vsel %vm678, %v633, 0
      %v773 = vsel %vm678, %v634, 0
      %v776 = vsel %vm678, %v635, 0
      %v779 = vsel %vm678, %v636, 0
      %v782 = vsel %vm678, %v637, 0
      %v785 = vsel %vm678, %v638, 0
      %v788 = vsel %vm678, %v639, 0
      %v791 = vsel %vm678, %v640, 0
      %v794 = vsel %vm678, %v641, 0
      %v797 = vsel %vm678, %v642, 0
      %v800 = vsel %vm678, %v643, 0
      %v803 = vsel %vm678, %v644, 0
      %v806 = vsel %vm678, %v645, 0
      %v809 = vsel %vm678, %v646, 0
      %v812 = vsel %vm678, %v647, 0
      %v815 = vsel %vm678, %v648, 0
      %v818 = vsel %vm678, %v649, 0
      %v821 = vsel %vm678, %v650, 0
      %v824 = vsel %vm678, %v651, 0
      %v827 = vsel %vm678, %v652, 0
      %v830 = vsel %vm678, %v653, 0
      %v833 = vsel %vm678, %v654, 0
      %v836 = vsel %vm678, %v655, 0
      %v839 = vsel %vm678, %v656, 0
      %v842 = vsel %vm678, %v657, 0
      %v845 = vsel %vm678, %v658, 0
      %v848 = vsel %vm678, %v659, 0
      %v851 = vsel %vm678, %v660, 0
      %v854 = vsel %vm678, %v661, 0
      %v857 = vsel %vm678, %v662, 0
      %v860 = vsel %vm678, %v663, 0
      %v863 = vsel %vm678, %v664, 0
      %v866 = vsel %vm678, %v665, 0
      %v869 = vsel %vm678, %v666, 0
      %vm871 = vcmask 1044480
      %vm872 = vcmask 1045504
      %v873 = vsel %vm871, 4294967295, 65535
      %v874 = vsel %vm872, %v873, 0
      %v876 = vand.u32 %v676, %v874
      %878 = vmatpush.bf16.msra.mxu0 0
      %879 = vmatpush.bf16.msra.mxu0 0
      %880 = vmatpush.bf16.msra.mxu0 0
      %881 = vmatpush.bf16.msra.mxu0 0
      %882 = vmatpush.bf16.msra.mxu0 0
      %883 = vmatpush.bf16.msra.mxu0 0
      %884 = vmatpush.bf16.msra.mxu0 %v876
      %885 = vmatpush.bf16.msra.mxu0 %v675
      %886 = vmatmul.bf16.gmra.mxu0 %v680
      %v887 = vpop.f32.mrf.mxu0
      %v888 = vadd.f32 %v345, %v887
      %v889 = vpop.f32.mrf.mxu0
      %v890 = vadd.f32 %v345, %v889
      %891 = vmatmul.bf16.gmra.mxu0 %v683
      %v892 = vpop.f32.mrf.mxu0
      %v893 = vadd.f32 %v345, %v892
      %v894 = vpop.f32.mrf.mxu0
      %v895 = vadd.f32 %v345, %v894
      %896 = vmatmul.bf16.gmra.mxu0 %v686
      %v897 = vpop.f32.mrf.mxu0
      %v898 = vadd.f32 %v345, %v897
      %v899 = vpop.f32.mrf.mxu0
      %v900 = vadd.f32 %v345, %v899
      %901 = vmatmul.bf16.gmra.mxu0 %v689
      %v902 = vpop.f32.mrf.mxu0
      %v903 = vadd.f32 %v345, %v902
      %v904 = vpop.f32.mrf.mxu0
      %v905 = vadd.f32 %v345, %v904
      %906 = vmatmul.bf16.gmra.mxu0 %v692
      %v907 = vpop.f32.mrf.mxu0
      %v908 = vadd.f32 %v345, %v907
      %v909 = vpop.f32.mrf.mxu0
      %v910 = vadd.f32 %v345, %v909
      %911 = vmatmul.bf16.gmra.mxu0 %v695
      %v912 = vpop.f32.mrf.mxu0
      %v913 = vadd.f32 %v345, %v912
      %v914 = vpop.f32.mrf.mxu0
      %v915 = vadd.f32 %v345, %v914
      %916 = vmatmul.bf16.gmra.mxu0 %v698
      %v917 = vpop.f32.mrf.mxu0
      %v918 = vadd.f32 %v345, %v917
      %v919 = vpop.f32.mrf.mxu0
      %v920 = vadd.f32 %v345, %v919
      %921 = vmatmul.bf16.gmra.mxu0 %v701
      %v922 = vpop.f32.mrf.mxu0
      %v923 = vadd.f32 %v345, %v922
      %v924 = vpop.f32.mrf.mxu0
      %v925 = vadd.f32 %v345, %v924
      %926 = vmatmul.bf16.gmra.mxu0 %v704
      %v927 = vpop.f32.mrf.mxu0
      %v928 = vadd.f32 %v345, %v927
      %v929 = vpop.f32.mrf.mxu0
      %v930 = vadd.f32 %v345, %v929
      %931 = vmatmul.bf16.gmra.mxu0 %v707
      %v932 = vpop.f32.mrf.mxu0
      %v933 = vadd.f32 %v345, %v932
      %v934 = vpop.f32.mrf.mxu0
      %v935 = vadd.f32 %v345, %v934
      %936 = vmatmul.bf16.gmra.mxu0 %v710
      %v937 = vpop.f32.mrf.mxu0
      %v938 = vadd.f32 %v345, %v937
      %v939 = vpop.f32.mrf.mxu0
      %v940 = vadd.f32 %v345, %v939
      %941 = vmatmul.bf16.gmra.mxu0 %v713
      %v942 = vpop.f32.mrf.mxu0
      %v943 = vadd.f32 %v345, %v942
      %v944 = vpop.f32.mrf.mxu0
      %v945 = vadd.f32 %v345, %v944
      %946 = vmatmul.bf16.gmra.mxu0 %v716
      %v947 = vpop.f32.mrf.mxu0
      %v948 = vadd.f32 %v345, %v947
      %v949 = vpop.f32.mrf.mxu0
      %v950 = vadd.f32 %v345, %v949
      %951 = vmatmul.bf16.gmra.mxu0 %v719
      %v952 = vpop.f32.mrf.mxu0
      %v953 = vadd.f32 %v345, %v952
      %v954 = vpop.f32.mrf.mxu0
      %v955 = vadd.f32 %v345, %v954
      %956 = vmatmul.bf16.gmra.mxu0 %v722
      %v957 = vpop.f32.mrf.mxu0
      %v958 = vadd.f32 %v345, %v957
      %v959 = vpop.f32.mrf.mxu0
      %v960 = vadd.f32 %v345, %v959
      %961 = vmatmul.bf16.gmra.mxu0 %v725
      %v962 = vpop.f32.mrf.mxu0
      %v963 = vadd.f32 %v345, %v962
      %v964 = vpop.f32.mrf.mxu0
      %v965 = vadd.f32 %v345, %v964
      %966 = vmatmul.bf16.gmra.mxu0 %v728
      %v967 = vpop.f32.mrf.mxu0
      %v968 = vadd.f32 %v345, %v967
      %v969 = vpop.f32.mrf.mxu0
      %v970 = vadd.f32 %v345, %v969
      %971 = vmatmul.bf16.gmra.mxu0 %v731
      %v972 = vpop.f32.mrf.mxu0
      %v973 = vadd.f32 %v345, %v972
      %v974 = vpop.f32.mrf.mxu0
      %v975 = vadd.f32 %v345, %v974
      %976 = vmatmul.bf16.gmra.mxu0 %v734
      %v977 = vpop.f32.mrf.mxu0
      %v978 = vadd.f32 %v345, %v977
      %v979 = vpop.f32.mrf.mxu0
      %v980 = vadd.f32 %v345, %v979
      %981 = vmatmul.bf16.gmra.mxu0 %v737
      %v982 = vpop.f32.mrf.mxu0
      %v983 = vadd.f32 %v345, %v982
      %v984 = vpop.f32.mrf.mxu0
      %v985 = vadd.f32 %v345, %v984
      %986 = vmatmul.bf16.gmra.mxu0 %v740
      %v987 = vpop.f32.mrf.mxu0
      %v988 = vadd.f32 %v345, %v987
      %v989 = vpop.f32.mrf.mxu0
      %v990 = vadd.f32 %v345, %v989
      %991 = vmatmul.bf16.gmra.mxu0 %v743
      %v992 = vpop.f32.mrf.mxu0
      %v993 = vadd.f32 %v345, %v992
      %v994 = vpop.f32.mrf.mxu0
      %v995 = vadd.f32 %v345, %v994
      %996 = vmatmul.bf16.gmra.mxu0 %v746
      %v997 = vpop.f32.mrf.mxu0
      %v998 = vadd.f32 %v345, %v997
      %v999 = vpop.f32.mrf.mxu0
      %v1000 = vadd.f32 %v345, %v999
      %1001 = vmatmul.bf16.gmra.mxu0 %v749
      %v1002 = vpop.f32.mrf.mxu0
      %v1003 = vadd.f32 %v345, %v1002
      %v1004 = vpop.f32.mrf.mxu0
      %v1005 = vadd.f32 %v345, %v1004
      %1006 = vmatmul.bf16.gmra.mxu0 %v752
      %v1007 = vpop.f32.mrf.mxu0
      %v1008 = vadd.f32 %v345, %v1007
      %v1009 = vpop.f32.mrf.mxu0
      %v1010 = vadd.f32 %v345, %v1009
      %1011 = vmatmul.bf16.gmra.mxu0 %v755
      %v1012 = vpop.f32.mrf.mxu0
      %v1013 = vadd.f32 %v345, %v1012
      %v1014 = vpop.f32.mrf.mxu0
      %v1015 = vadd.f32 %v345, %v1014
      %1016 = vmatmul.bf16.gmra.mxu0 %v758
      %v1017 = vpop.f32.mrf.mxu0
      %v1018 = vadd.f32 %v345, %v1017
      %v1019 = vpop.f32.mrf.mxu0
      %v1020 = vadd.f32 %v345, %v1019
      %1021 = vmatmul.bf16.gmra.mxu0 %v761
      %v1022 = vpop.f32.mrf.mxu0
      %v1023 = vadd.f32 %v345, %v1022
      %v1024 = vpop.f32.mrf.mxu0
      %v1025 = vadd.f32 %v345, %v1024
      %1026 = vmatmul.bf16.gmra.mxu0 %v764
      %v1027 = vpop.f32.mrf.mxu0
      %v1028 = vadd.f32 %v345, %v1027
      %v1029 = vpop.f32.mrf.mxu0
      %v1030 = vadd.f32 %v345, %v1029
      %1031 = vmatmul.bf16.gmra.mxu0 %v767
      %v1032 = vpop.f32.mrf.mxu0
      %v1033 = vadd.f32 %v345, %v1032
      %v1034 = vpop.f32.mrf.mxu0
      %v1035 = vadd.f32 %v345, %v1034
      %1036 = vmatmul.bf16.gmra.mxu0 %v770
      %v1037 = vpop.f32.mrf.mxu0
      %v1038 = vadd.f32 %v345, %v1037
      %v1039 = vpop.f32.mrf.mxu0
      %v1040 = vadd.f32 %v345, %v1039
      %1041 = vmatmul.bf16.gmra.mxu0 %v773
      %v1042 = vpop.f32.mrf.mxu0
      %v1043 = vadd.f32 %v345, %v1042
      %v1044 = vpop.f32.mrf.mxu0
      %v1045 = vadd.f32 %v345, %v1044
      %1046 = vmatmul.bf16.gmra.mxu0 %v776
      %v1047 = vpop.f32.mrf.mxu0
      %v1048 = vadd.f32 %v345, %v1047
      %v1049 = vpop.f32.mrf.mxu0
      %v1050 = vadd.f32 %v345, %v1049
      %1051 = vmatmul.bf16.gmra.mxu0 %v779
      %v1052 = vpop.f32.mrf.mxu0
      %v1053 = vadd.f32 %v345, %v1052
      %v1054 = vpop.f32.mrf.mxu0
      %v1055 = vadd.f32 %v345, %v1054
      %1056 = vmatmul.bf16.gmra.mxu0 %v782
      %v1057 = vpop.f32.mrf.mxu0
      %v1058 = vadd.f32 %v345, %v1057
      %v1059 = vpop.f32.mrf.mxu0
      %v1060 = vadd.f32 %v345, %v1059
      %1061 = vmatmul.bf16.gmra.mxu0 %v785
      %v1062 = vpop.f32.mrf.mxu0
      %v1063 = vadd.f32 %v345, %v1062
      %v1064 = vpop.f32.mrf.mxu0
      %v1065 = vadd.f32 %v345, %v1064
      %1066 = vmatmul.bf16.gmra.mxu0 %v788
      %v1067 = vpop.f32.mrf.mxu0
      %v1068 = vadd.f32 %v345, %v1067
      %v1069 = vpop.f32.mrf.mxu0
      %v1070 = vadd.f32 %v345, %v1069
      %1071 = vmatmul.bf16.gmra.mxu0 %v791
      %v1072 = vpop.f32.mrf.mxu0
      %v1073 = vadd.f32 %v345, %v1072
      %v1074 = vpop.f32.mrf.mxu0
      %v1075 = vadd.f32 %v345, %v1074
      %1076 = vmatmul.bf16.gmra.mxu0 %v794
      %v1077 = vpop.f32.mrf.mxu0
      %v1078 = vadd.f32 %v345, %v1077
      %v1079 = vpop.f32.mrf.mxu0
      %v1080 = vadd.f32 %v345, %v1079
      %1081 = vmatmul.bf16.gmra.mxu0 %v797
      %v1082 = vpop.f32.mrf.mxu0
      %v1083 = vadd.f32 %v345, %v1082
      %v1084 = vpop.f32.mrf.mxu0
      %v1085 = vadd.f32 %v345, %v1084
      %1086 = vmatmul.bf16.gmra.mxu0 %v800
      %v1087 = vpop.f32.mrf.mxu0
      %v1088 = vadd.f32 %v345, %v1087
      %v1089 = vpop.f32.mrf.mxu0
      %v1090 = vadd.f32 %v345, %v1089
      %1091 = vmatmul.bf16.gmra.mxu0 %v803
      %v1092 = vpop.f32.mrf.mxu0
      %v1093 = vadd.f32 %v345, %v1092
      %v1094 = vpop.f32.mrf.mxu0
      %v1095 = vadd.f32 %v345, %v1094
      %1096 = vmatmul.bf16.gmra.mxu0 %v806
      %v1097 = vpop.f32.mrf.mxu0
      %v1098 = vadd.f32 %v345, %v1097
      %v1099 = vpop.f32.mrf.mxu0
      %v1100 = vadd.f32 %v345, %v1099
      %1101 = vmatmul.bf16.gmra.mxu0 %v809
      %v1102 = vpop.f32.mrf.mxu0
      %v1103 = vadd.f32 %v345, %v1102
      %v1104 = vpop.f32.mrf.mxu0
      %v1105 = vadd.f32 %v345, %v1104
      %1106 = vmatmul.bf16.gmra.mxu0 %v812
      %v1107 = vpop.f32.mrf.mxu0
      %v1108 = vadd.f32 %v345, %v1107
      %v1109 = vpop.f32.mrf.mxu0
      %v1110 = vadd.f32 %v345, %v1109
      %1111 = vmatmul.bf16.gmra.mxu0 %v815
      %v1112 = vpop.f32.mrf.mxu0
      %v1113 = vadd.f32 %v345, %v1112
      %v1114 = vpop.f32.mrf.mxu0
      %v1115 = vadd.f32 %v345, %v1114
      %1116 = vmatmul.bf16.gmra.mxu0 %v818
      %v1117 = vpop.f32.mrf.mxu0
      %v1118 = vadd.f32 %v345, %v1117
      %v1119 = vpop.f32.mrf.mxu0
      %v1120 = vadd.f32 %v345, %v1119
      %1121 = vmatmul.bf16.gmra.mxu0 %v821
      %v1122 = vpop.f32.mrf.mxu0
      %v1123 = vadd.f32 %v345, %v1122
      %v1124 = vpop.f32.mrf.mxu0
      %v1125 = vadd.f32 %v345, %v1124
      %1126 = vmatmul.bf16.gmra.mxu0 %v824
      %v1127 = vpop.f32.mrf.mxu0
      %v1128 = vadd.f32 %v345, %v1127
      %v1129 = vpop.f32.mrf.mxu0
      %v1130 = vadd.f32 %v345, %v1129
      %1131 = vmatmul.bf16.gmra.mxu0 %v827
      %v1132 = vpop.f32.mrf.mxu0
      %v1133 = vadd.f32 %v345, %v1132
      %v1134 = vpop.f32.mrf.mxu0
      %v1135 = vadd.f32 %v345, %v1134
      %1136 = vmatmul.bf16.gmra.mxu0 %v830
      %v1137 = vpop.f32.mrf.mxu0
      %v1138 = vadd.f32 %v345, %v1137
      %v1139 = vpop.f32.mrf.mxu0
      %v1140 = vadd.f32 %v345, %v1139
      %1141 = vmatmul.bf16.gmra.mxu0 %v833
      %v1142 = vpop.f32.mrf.mxu0
      %v1143 = vadd.f32 %v345, %v1142
      %v1144 = vpop.f32.mrf.mxu0
      %v1145 = vadd.f32 %v345, %v1144
      %1146 = vmatmul.bf16.gmra.mxu0 %v836
      %v1147 = vpop.f32.mrf.mxu0
      %v1148 = vadd.f32 %v345, %v1147
      %v1149 = vpop.f32.mrf.mxu0
      %v1150 = vadd.f32 %v345, %v1149
      %1151 = vmatmul.bf16.gmra.mxu0 %v839
      %v1152 = vpop.f32.mrf.mxu0
      %v1153 = vadd.f32 %v345, %v1152
      %v1154 = vpop.f32.mrf.mxu0
      %v1155 = vadd.f32 %v345, %v1154
      %1156 = vmatmul.bf16.gmra.mxu0 %v842
      %v1157 = vpop.f32.mrf.mxu0
      %v1158 = vadd.f32 %v345, %v1157
      %v1159 = vpop.f32.mrf.mxu0
      %v1160 = vadd.f32 %v345, %v1159
      %1161 = vmatmul.bf16.gmra.mxu0 %v845
      %v1162 = vpop.f32.mrf.mxu0
      %v1163 = vadd.f32 %v345, %v1162
      %v1164 = vpop.f32.mrf.mxu0
      %v1165 = vadd.f32 %v345, %v1164
      %1166 = vmatmul.bf16.gmra.mxu0 %v848
      %v1167 = vpop.f32.mrf.mxu0
      %v1168 = vadd.f32 %v345, %v1167
      %v1169 = vpop.f32.mrf.mxu0
      %v1170 = vadd.f32 %v345, %v1169
      %1171 = vmatmul.bf16.gmra.mxu0 %v851
      %v1172 = vpop.f32.mrf.mxu0
      %v1173 = vadd.f32 %v345, %v1172
      %v1174 = vpop.f32.mrf.mxu0
      %v1175 = vadd.f32 %v345, %v1174
      %1176 = vmatmul.bf16.gmra.mxu0 %v854
      %v1177 = vpop.f32.mrf.mxu0
      %v1178 = vadd.f32 %v345, %v1177
      %v1179 = vpop.f32.mrf.mxu0
      %v1180 = vadd.f32 %v345, %v1179
      %1181 = vmatmul.bf16.gmra.mxu0 %v857
      %v1182 = vpop.f32.mrf.mxu0
      %v1183 = vadd.f32 %v345, %v1182
      %v1184 = vpop.f32.mrf.mxu0
      %v1185 = vadd.f32 %v345, %v1184
      %1186 = vmatmul.bf16.gmra.mxu0 %v860
      %v1187 = vpop.f32.mrf.mxu0
      %v1188 = vadd.f32 %v345, %v1187
      %v1189 = vpop.f32.mrf.mxu0
      %v1190 = vadd.f32 %v345, %v1189
      %1191 = vmatmul.bf16.gmra.mxu0 %v863
      %v1192 = vpop.f32.mrf.mxu0
      %v1193 = vadd.f32 %v345, %v1192
      %v1194 = vpop.f32.mrf.mxu0
      %v1195 = vadd.f32 %v345, %v1194
      %1196 = vmatmul.bf16.gmra.mxu0 %v866
      %v1197 = vpop.f32.mrf.mxu0
      %v1198 = vadd.f32 %v345, %v1197
      %v1199 = vpop.f32.mrf.mxu0
      %v1200 = vadd.f32 %v345, %v1199
      %1201 = vmatmul.bf16.gmra.mxu0 %v869
      %v1202 = vpop.f32.mrf.mxu0
      %v1203 = vadd.f32 %v345, %v1202
      %v1204 = vpop.f32.mrf.mxu0
      %v1205 = vadd.f32 %v345, %v1204
      %1206 = vdwg.mxu0
      %v1207 = vmax.f32 %v888, 0.0
      %v1208 = vmax.f32 %v890, 0.0
      %v1209 = vmax.f32 %v893, 0.0
      %v1210 = vmax.f32 %v895, 0.0
      %v1211 = vmax.f32 %v898, 0.0
      %v1212 = vmax.f32 %v900, 0.0
      %v1213 = vmax.f32 %v903, 0.0
      %v1214 = vmax.f32 %v905, 0.0
      %v1215 = vmax.f32 %v908, 0.0
      %v1216 = vmax.f32 %v910, 0.0
      %v1217 = vmax.f32 %v913, 0.0
      %v1218 = vmax.f32 %v915, 0.0
      %v1219 = vmax.f32 %v918, 0.0
      %v1220 = vmax.f32 %v920, 0.0
      %v1221 = vmax.f32 %v923, 0.0
      %v1222 = vmax.f32 %v925, 0.0
      %v1223 = vmax.f32 %v928, 0.0
      %v1224 = vmax.f32 %v930, 0.0
      %v1225 = vmax.f32 %v933, 0.0
      %v1226 = vmax.f32 %v935, 0.0
      %v1227 = vmax.f32 %v938, 0.0
      %v1228 = vmax.f32 %v940, 0.0
      %v1229 = vmax.f32 %v943, 0.0
      %v1230 = vmax.f32 %v945, 0.0
      %v1231 = vmax.f32 %v948, 0.0
      %v1232 = vmax.f32 %v950, 0.0
      %v1233 = vmax.f32 %v953, 0.0
      %v1234 = vmax.f32 %v955, 0.0
      %v1235 = vmax.f32 %v958, 0.0
      %v1236 = vmax.f32 %v960, 0.0
      %v1237 = vmax.f32 %v963, 0.0
      %v1238 = vmax.f32 %v965, 0.0
      %v1239 = vmax.f32 %v968, 0.0
      %v1240 = vmax.f32 %v970, 0.0
      %v1241 = vmax.f32 %v973, 0.0
      %v1242 = vmax.f32 %v975, 0.0
      %v1243 = vmax.f32 %v978, 0.0
      %v1244 = vmax.f32 %v980, 0.0
      %v1245 = vmax.f32 %v983, 0.0
      %v1246 = vmax.f32 %v985, 0.0
      %v1247 = vmax.f32 %v988, 0.0
      %v1248 = vmax.f32 %v990, 0.0
      %v1249 = vmax.f32 %v993, 0.0
      %v1250 = vmax.f32 %v995, 0.0
      %v1251 = vmax.f32 %v998, 0.0
      %v1252 = vmax.f32 %v1000, 0.0
      %v1253 = vmax.f32 %v1003, 0.0
      %v1254 = vmax.f32 %v1005, 0.0
      %v1255 = vmax.f32 %v1008, 0.0
      %v1256 = vmax.f32 %v1010, 0.0
      %v1257 = vmax.f32 %v1013, 0.0
      %v1258 = vmax.f32 %v1015, 0.0
      %v1259 = vmax.f32 %v1018, 0.0
      %v1260 = vmax.f32 %v1020, 0.0
      %v1261 = vmax.f32 %v1023, 0.0
      %v1262 = vmax.f32 %v1025, 0.0
      %v1263 = vmax.f32 %v1028, 0.0
      %v1264 = vmax.f32 %v1030, 0.0
      %v1265 = vmax.f32 %v1033, 0.0
      %v1266 = vmax.f32 %v1035, 0.0
      %v1267 = vmax.f32 %v1038, 0.0
      %v1268 = vmax.f32 %v1040, 0.0
      %v1269 = vmax.f32 %v1043, 0.0
      %v1270 = vmax.f32 %v1045, 0.0
      %v1271 = vmax.f32 %v1048, 0.0
      %v1272 = vmax.f32 %v1050, 0.0
      %v1273 = vmax.f32 %v1053, 0.0
      %v1274 = vmax.f32 %v1055, 0.0
      %v1275 = vmax.f32 %v1058, 0.0
      %v1276 = vmax.f32 %v1060, 0.0
      %v1277 = vmax.f32 %v1063, 0.0
      %v1278 = vmax.f32 %v1065, 0.0
      %v1279 = vmax.f32 %v1068, 0.0
      %v1280 = vmax.f32 %v1070, 0.0
      %v1281 = vmax.f32 %v1073, 0.0
      %v1282 = vmax.f32 %v1075, 0.0
      %v1283 = vmax.f32 %v1078, 0.0
      %v1284 = vmax.f32 %v1080, 0.0
      %v1285 = vmax.f32 %v1083, 0.0
      %v1286 = vmax.f32 %v1085, 0.0
      %v1287 = vmax.f32 %v1088, 0.0
      %v1288 = vmax.f32 %v1090, 0.0
      %v1289 = vmax.f32 %v1093, 0.0
      %v1290 = vmax.f32 %v1095, 0.0
      %v1291 = vmax.f32 %v1098, 0.0
      %v1292 = vmax.f32 %v1100, 0.0
      %v1293 = vmax.f32 %v1103, 0.0
      %v1294 = vmax.f32 %v1105, 0.0
      %v1295 = vmax.f32 %v1108, 0.0
      %v1296 = vmax.f32 %v1110, 0.0
      %v1297 = vmax.f32 %v1113, 0.0
      %v1298 = vmax.f32 %v1115, 0.0
      %v1299 = vmax.f32 %v1118, 0.0
      %v1300 = vmax.f32 %v1120, 0.0
      %v1301 = vmax.f32 %v1123, 0.0
      %v1302 = vmax.f32 %v1125, 0.0
      %v1303 = vmax.f32 %v1128, 0.0
      %v1304 = vmax.f32 %v1130, 0.0
      %v1305 = vmax.f32 %v1133, 0.0
      %v1306 = vmax.f32 %v1135, 0.0
      %v1307 = vmax.f32 %v1138, 0.0
      %v1308 = vmax.f32 %v1140, 0.0
      %v1309 = vmax.f32 %v1143, 0.0
      %v1310 = vmax.f32 %v1145, 0.0
      %v1311 = vmax.f32 %v1148, 0.0
      %v1312 = vmax.f32 %v1150, 0.0
      %v1313 = vmax.f32 %v1153, 0.0
      %v1314 = vmax.f32 %v1155, 0.0
      %v1315 = vmax.f32 %v1158, 0.0
      %v1316 = vmax.f32 %v1160, 0.0
      %v1317 = vmax.f32 %v1163, 0.0
      %v1318 = vmax.f32 %v1165, 0.0
      %v1319 = vmax.f32 %v1168, 0.0
      %v1320 = vmax.f32 %v1170, 0.0
      %v1321 = vmax.f32 %v1173, 0.0
      %v1322 = vmax.f32 %v1175, 0.0
      %v1323 = vmax.f32 %v1178, 0.0
      %v1324 = vmax.f32 %v1180, 0.0
      %v1325 = vmax.f32 %v1183, 0.0
      %v1326 = vmax.f32 %v1185, 0.0
      %v1327 = vmax.f32 %v1188, 0.0
      %v1328 = vmax.f32 %v1190, 0.0
      %v1329 = vmax.f32 %v1193, 0.0
      %v1330 = vmax.f32 %v1195, 0.0
      %v1331 = vmax.f32 %v1198, 0.0
      %v1332 = vmax.f32 %v1200, 0.0
      %v1333 = vmax.f32 %v1203, 0.0
      %v1334 = vmax.f32 %v1205, 0.0
      %v1335 = vpack.c.bf16 %v1207, %v1207
      %v1336 = vpack.c.bf16 %v1208, %v1208
      %v1337 = vpack.c.bf16 %v1209, %v1209
      %v1338 = vpack.c.bf16 %v1210, %v1210
      %v1339 = vpack.c.bf16 %v1211, %v1211
      %v1340 = vpack.c.bf16 %v1212, %v1212
      %v1341 = vpack.c.bf16 %v1213, %v1213
      %v1342 = vpack.c.bf16 %v1214, %v1214
      %v1343 = vpack.c.bf16 %v1215, %v1215
      %v1344 = vpack.c.bf16 %v1216, %v1216
      %v1345 = vpack.c.bf16 %v1217, %v1217
      %v1346 = vpack.c.bf16 %v1218, %v1218
      %v1347 = vpack.c.bf16 %v1219, %v1219
      %v1348 = vpack.c.bf16 %v1220, %v1220
      %v1349 = vpack.c.bf16 %v1221, %v1221
      %v1350 = vpack.c.bf16 %v1222, %v1222
      %v1351 = vpack.c.bf16 %v1223, %v1223
      %v1352 = vpack.c.bf16 %v1224, %v1224
      %v1353 = vpack.c.bf16 %v1225, %v1225
      %v1354 = vpack.c.bf16 %v1226, %v1226
      %v1355 = vpack.c.bf16 %v1227, %v1227
      %v1356 = vpack.c.bf16 %v1228, %v1228
      %v1357 = vpack.c.bf16 %v1229, %v1229
      %v1358 = vpack.c.bf16 %v1230, %v1230
      %v1359 = vpack.c.bf16 %v1231, %v1231
      %v1360 = vpack.c.bf16 %v1232, %v1232
      %v1361 = vpack.c.bf16 %v1233, %v1233
      %v1362 = vpack.c.bf16 %v1234, %v1234
      %v1363 = vpack.c.bf16 %v1235, %v1235
      %v1364 = vpack.c.bf16 %v1236, %v1236
      %v1365 = vpack.c.bf16 %v1237, %v1237
      %v1366 = vpack.c.bf16 %v1238, %v1238
      %v1367 = vpack.c.bf16 %v1239, %v1239
      %v1368 = vpack.c.bf16 %v1240, %v1240
      %v1369 = vpack.c.bf16 %v1241, %v1241
      %v1370 = vpack.c.bf16 %v1242, %v1242
      %v1371 = vpack.c.bf16 %v1243, %v1243
      %v1372 = vpack.c.bf16 %v1244, %v1244
      %v1373 = vpack.c.bf16 %v1245, %v1245
      %v1374 = vpack.c.bf16 %v1246, %v1246
      %v1375 = vpack.c.bf16 %v1247, %v1247
      %v1376 = vpack.c.bf16 %v1248, %v1248
      %v1377 = vpack.c.bf16 %v1249, %v1249
      %v1378 = vpack.c.bf16 %v1250, %v1250
      %v1379 = vpack.c.bf16 %v1251, %v1251
      %v1380 = vpack.c.bf16 %v1252, %v1252
      %v1381 = vpack.c.bf16 %v1253, %v1253
      %v1382 = vpack.c.bf16 %v1254, %v1254
      %v1383 = vpack.c.bf16 %v1255, %v1255
      %v1384 = vpack.c.bf16 %v1256, %v1256
      %v1385 = vpack.c.bf16 %v1257, %v1257
      %v1386 = vpack.c.bf16 %v1258, %v1258
      %v1387 = vpack.c.bf16 %v1259, %v1259
      %v1388 = vpack.c.bf16 %v1260, %v1260
      %v1389 = vpack.c.bf16 %v1261, %v1261
      %v1390 = vpack.c.bf16 %v1262, %v1262
      %v1391 = vpack.c.bf16 %v1263, %v1263
      %v1392 = vpack.c.bf16 %v1264, %v1264
      %v1393 = vpack.c.bf16 %v1265, %v1265
      %v1394 = vpack.c.bf16 %v1266, %v1266
      %v1395 = vpack.c.bf16 %v1267, %v1267
      %v1396 = vpack.c.bf16 %v1268, %v1268
      %v1397 = vpack.c.bf16 %v1269, %v1269
      %v1398 = vpack.c.bf16 %v1270, %v1270
      %v1399 = vpack.c.bf16 %v1271, %v1271
      %v1400 = vpack.c.bf16 %v1272, %v1272
      %v1401 = vpack.c.bf16 %v1273, %v1273
      %v1402 = vpack.c.bf16 %v1274, %v1274
      %v1403 = vpack.c.bf16 %v1275, %v1275
      %v1404 = vpack.c.bf16 %v1276, %v1276
      %v1405 = vpack.c.bf16 %v1277, %v1277
      %v1406 = vpack.c.bf16 %v1278, %v1278
      %v1407 = vpack.c.bf16 %v1279, %v1279
      %v1408 = vpack.c.bf16 %v1280, %v1280
      %v1409 = vpack.c.bf16 %v1281, %v1281
      %v1410 = vpack.c.bf16 %v1282, %v1282
      %v1411 = vpack.c.bf16 %v1283, %v1283
      %v1412 = vpack.c.bf16 %v1284, %v1284
      %v1413 = vpack.c.bf16 %v1285, %v1285
      %v1414 = vpack.c.bf16 %v1286, %v1286
      %v1415 = vpack.c.bf16 %v1287, %v1287
      %v1416 = vpack.c.bf16 %v1288, %v1288
      %v1417 = vpack.c.bf16 %v1289, %v1289
      %v1418 = vpack.c.bf16 %v1290, %v1290
      %v1419 = vpack.c.bf16 %v1291, %v1291
      %v1420 = vpack.c.bf16 %v1292, %v1292
      %v1421 = vpack.c.bf16 %v1293, %v1293
      %v1422 = vpack.c.bf16 %v1294, %v1294
      %v1423 = vpack.c.bf16 %v1295, %v1295
      %v1424 = vpack.c.bf16 %v1296, %v1296
      %v1425 = vpack.c.bf16 %v1297, %v1297
      %v1426 = vpack.c.bf16 %v1298, %v1298
      %v1427 = vpack.c.bf16 %v1299, %v1299
      %v1428 = vpack.c.bf16 %v1300, %v1300
      %v1429 = vpack.c.bf16 %v1301, %v1301
      %v1430 = vpack.c.bf16 %v1302, %v1302
      %v1431 = vpack.c.bf16 %v1303, %v1303
      %v1432 = vpack.c.bf16 %v1304, %v1304
      %v1433 = vpack.c.bf16 %v1305, %v1305
      %v1434 = vpack.c.bf16 %v1306, %v1306
      %v1435 = vpack.c.bf16 %v1307, %v1307
      %v1436 = vpack.c.bf16 %v1308, %v1308
      %v1437 = vpack.c.bf16 %v1309, %v1309
      %v1438 = vpack.c.bf16 %v1310, %v1310
      %v1439 = vpack.c.bf16 %v1311, %v1311
      %v1440 = vpack.c.bf16 %v1312, %v1312
      %v1441 = vpack.c.bf16 %v1313, %v1313
      %v1442 = vpack.c.bf16 %v1314, %v1314
      %v1443 = vpack.c.bf16 %v1315, %v1315
      %v1444 = vpack.c.bf16 %v1316, %v1316
      %v1445 = vpack.c.bf16 %v1317, %v1317
      %v1446 = vpack.c.bf16 %v1318, %v1318
      %v1447 = vpack.c.bf16 %v1319, %v1319
      %v1448 = vpack.c.bf16 %v1320, %v1320
      %v1449 = vpack.c.bf16 %v1321, %v1321
      %v1450 = vpack.c.bf16 %v1322, %v1322
      %v1451 = vpack.c.bf16 %v1323, %v1323
      %v1452 = vpack.c.bf16 %v1324, %v1324
      %v1453 = vpack.c.bf16 %v1325, %v1325
      %v1454 = vpack.c.bf16 %v1326, %v1326
      %v1455 = vpack.c.bf16 %v1327, %v1327
      %v1456 = vpack.c.bf16 %v1328, %v1328
      %v1457 = vpack.c.bf16 %v1329, %v1329
      %v1458 = vpack.c.bf16 %v1330, %v1330
      %v1459 = vpack.c.bf16 %v1331, %v1331
      %v1460 = vpack.c.bf16 %v1332, %v1332
      %v1461 = vpack.c.bf16 %v1333, %v1333
      %v1462 = vpack.c.bf16 %v1334, %v1334
      %vm1463 = vcmask 519168
      %1464 = vst.msk [vmem:[%s208] sm:$0xf] %vm1463, %v1335
      %1465 = vst.msk [vmem:[%s208 + $0x4] sm:$0xf] %vm1463, %v1336
      %1466 = vst.msk [vmem:[%s208 + $0x8] sm:$0xf] %vm1463, %v1337
      %1467 = vst.msk [vmem:[%s208 + $0xc] sm:$0xf] %vm1463, %v1338
      %1468 = vst.msk [vmem:[%s208 + $0x10] sm:$0xf] %vm1463, %v1339
      %1469 = vst.msk [vmem:[%s208 + $0x14] sm:$0xf] %vm1463, %v1340
      %1470 = vst.msk [vmem:[%s208 + $0x18] sm:$0xf] %vm1463, %v1341
      %1471 = vst.msk [vmem:[%s208 + $0x1c] sm:$0xf] %vm1463, %v1342
      %1472 = vst.msk [vmem:[%s208 + $0x20] sm:$0xf] %vm1463, %v1343
      %1473 = vst.msk [vmem:[%s208 + $0x24] sm:$0xf] %vm1463, %v1344
      %1474 = vst.msk [vmem:[%s208 + $0x28] sm:$0xf] %vm1463, %v1345
      %1475 = vst.msk [vmem:[%s208 + $0x2c] sm:$0xf] %vm1463, %v1346
      %1476 = vst.msk [vmem:[%s208 + $0x30] sm:$0xf] %vm1463, %v1347
      %1477 = vst.msk [vmem:[%s208 + $0x34] sm:$0xf] %vm1463, %v1348
      %1478 = vst.msk [vmem:[%s208 + $0x38] sm:$0xf] %vm1463, %v1349
      %1479 = vst.msk [vmem:[%s208 + $0x3c] sm:$0xf] %vm1463, %v1350
      %1480 = vst.msk [vmem:[%s208 + $0x40] sm:$0xf] %vm1463, %v1351
      %1481 = vst.msk [vmem:[%s208 + $0x44] sm:$0xf] %vm1463, %v1352
      %1482 = vst.msk [vmem:[%s208 + $0x48] sm:$0xf] %vm1463, %v1353
      %1483 = vst.msk [vmem:[%s208 + $0x4c] sm:$0xf] %vm1463, %v1354
      %1484 = vst.msk [vmem:[%s208 + $0x50] sm:$0xf] %vm1463, %v1355
      %1485 = vst.msk [vmem:[%s208 + $0x54] sm:$0xf] %vm1463, %v1356
      %1486 = vst.msk [vmem:[%s208 + $0x58] sm:$0xf] %vm1463, %v1357
      %1487 = vst.msk [vmem:[%s208 + $0x5c] sm:$0xf] %vm1463, %v1358
      %1488 = vst.msk [vmem:[%s208 + $0x60] sm:$0xf] %vm1463, %v1359
      %1489 = vst.msk [vmem:[%s208 + $0x64] sm:$0xf] %vm1463, %v1360
      %1490 = vst.msk [vmem:[%s208 + $0x68] sm:$0xf] %vm1463, %v1361
      %1491 = vst.msk [vmem:[%s208 + $0x6c] sm:$0xf] %vm1463, %v1362
      %1492 = vst.msk [vmem:[%s208 + $0x70] sm:$0xf] %vm1463, %v1363
      %1493 = vst.msk [vmem:[%s208 + $0x74] sm:$0xf] %vm1463, %v1364
      %1494 = vst.msk [vmem:[%s208 + $0x78] sm:$0xf] %vm1463, %v1365
      %1495 = vst.msk [vmem:[%s208 + $0x7c] sm:$0xf] %vm1463, %v1366
      %1496 = vst.msk [vmem:[%s208 + $0x80] sm:$0xf] %vm1463, %v1367
      %1497 = vst.msk [vmem:[%s208 + $0x84] sm:$0xf] %vm1463, %v1368
      %1498 = vst.msk [vmem:[%s208 + $0x88] sm:$0xf] %vm1463, %v1369
      %1499 = vst.msk [vmem:[%s208 + $0x8c] sm:$0xf] %vm1463, %v1370
      %1500 = vst.msk [vmem:[%s208 + $0x90] sm:$0xf] %vm1463, %v1371
      %1501 = vst.msk [vmem:[%s208 + $0x94] sm:$0xf] %vm1463, %v1372
      %1502 = vst.msk [vmem:[%s208 + $0x98] sm:$0xf] %vm1463, %v1373
      %1503 = vst.msk [vmem:[%s208 + $0x9c] sm:$0xf] %vm1463, %v1374
      %1504 = vst.msk [vmem:[%s208 + $0xa0] sm:$0xf] %vm1463, %v1375
      %1505 = vst.msk [vmem:[%s208 + $0xa4] sm:$0xf] %vm1463, %v1376
      %1506 = vst.msk [vmem:[%s208 + $0xa8] sm:$0xf] %vm1463, %v1377
      %1507 = vst.msk [vmem:[%s208 + $0xac] sm:$0xf] %vm1463, %v1378
      %1508 = vst.msk [vmem:[%s208 + $0xb0] sm:$0xf] %vm1463, %v1379
      %1509 = vst.msk [vmem:[%s208 + $0xb4] sm:$0xf] %vm1463, %v1380
      %1510 = vst.msk [vmem:[%s208 + $0xb8] sm:$0xf] %vm1463, %v1381
      %1511 = vst.msk [vmem:[%s208 + $0xbc] sm:$0xf] %vm1463, %v1382
      %1512 = vst.msk [vmem:[%s208 + $0xc0] sm:$0xf] %vm1463, %v1383
      %1513 = vst.msk [vmem:[%s208 + $0xc4] sm:$0xf] %vm1463, %v1384
      %1514 = vst.msk [vmem:[%s208 + $0xc8] sm:$0xf] %vm1463, %v1385
      %1515 = vst.msk [vmem:[%s208 + $0xcc] sm:$0xf] %vm1463, %v1386
      %1516 = vst.msk [vmem:[%s208 + $0xd0] sm:$0xf] %vm1463, %v1387
      %1517 = vst.msk [vmem:[%s208 + $0xd4] sm:$0xf] %vm1463, %v1388
      %1518 = vst.msk [vmem:[%s208 + $0xd8] sm:$0xf] %vm1463, %v1389
      %1519 = vst.msk [vmem:[%s208 + $0xdc] sm:$0xf] %vm1463, %v1390
      %1520 = vst.msk [vmem:[%s208 + $0xe0] sm:$0xf] %vm1463, %v1391
      %1521 = vst.msk [vmem:[%s208 + $0xe4] sm:$0xf] %vm1463, %v1392
      %1522 = vst.msk [vmem:[%s208 + $0xe8] sm:$0xf] %vm1463, %v1393
      %1523 = vst.msk [vmem:[%s208 + $0xec] sm:$0xf] %vm1463, %v1394
      %1524 = vst.msk [vmem:[%s208 + $0xf0] sm:$0xf] %vm1463, %v1395
      %1525 = vst.msk [vmem:[%s208 + $0xf4] sm:$0xf] %vm1463, %v1396
      %1526 = vst.msk [vmem:[%s208 + $0xf8] sm:$0xf] %vm1463, %v1397
      %1527 = vst.msk [vmem:[%s208 + $0xfc] sm:$0xf] %vm1463, %v1398
      %1528 = vst.msk [vmem:[%s208 + $0x100] sm:$0xf] %vm1463, %v1399
      %1529 = vst.msk [vmem:[%s208 + $0x104] sm:$0xf] %vm1463, %v1400
      %1530 = vst.msk [vmem:[%s208 + $0x108] sm:$0xf] %vm1463, %v1401
      %1531 = vst.msk [vmem:[%s208 + $0x10c] sm:$0xf] %vm1463, %v1402
      %1532 = vst.msk [vmem:[%s208 + $0x110] sm:$0xf] %vm1463, %v1403
      %1533 = vst.msk [vmem:[%s208 + $0x114] sm:$0xf] %vm1463, %v1404
      %1534 = vst.msk [vmem:[%s208 + $0x118] sm:$0xf] %vm1463, %v1405
      %1535 = vst.msk [vmem:[%s208 + $0x11c] sm:$0xf] %vm1463, %v1406
      %1536 = vst.msk [vmem:[%s208 + $0x120] sm:$0xf] %vm1463, %v1407
      %1537 = vst.msk [vmem:[%s208 + $0x124] sm:$0xf] %vm1463, %v1408
      %1538 = vst.msk [vmem:[%s208 + $0x128] sm:$0xf] %vm1463, %v1409
      %1539 = vst.msk [vmem:[%s208 + $0x12c] sm:$0xf] %vm1463, %v1410
      %1540 = vst.msk [vmem:[%s208 + $0x130] sm:$0xf] %vm1463, %v1411
      %1541 = vst.msk [vmem:[%s208 + $0x134] sm:$0xf] %vm1463, %v1412
      %1542 = vst.msk [vmem:[%s208 + $0x138] sm:$0xf] %vm1463, %v1413
      %1543 = vst.msk [vmem:[%s208 + $0x13c] sm:$0xf] %vm1463, %v1414
      %1544 = vst.msk [vmem:[%s208 + $0x140] sm:$0xf] %vm1463, %v1415
      %1545 = vst.msk [vmem:[%s208 + $0x144] sm:$0xf] %vm1463, %v1416
      %1546 = vst.msk [vmem:[%s208 + $0x148] sm:$0xf] %vm1463, %v1417
      %1547 = vst.msk [vmem:[%s208 + $0x14c] sm:$0xf] %vm1463, %v1418
      %1548 = vst.msk [vmem:[%s208 + $0x150] sm:$0xf] %vm1463, %v1419
      %1549 = vst.msk [vmem:[%s208 + $0x154] sm:$0xf] %vm1463, %v1420
      %1550 = vst.msk [vmem:[%s208 + $0x158] sm:$0xf] %vm1463, %v1421
      %1551 = vst.msk [vmem:[%s208 + $0x15c] sm:$0xf] %vm1463, %v1422
      %1552 = vst.msk [vmem:[%s208 + $0x160] sm:$0xf] %vm1463, %v1423
      %1553 = vst.msk [vmem:[%s208 + $0x164] sm:$0xf] %vm1463, %v1424
      %1554 = vst.msk [vmem:[%s208 + $0x168] sm:$0xf] %vm1463, %v1425
      %1555 = vst.msk [vmem:[%s208 + $0x16c] sm:$0xf] %vm1463, %v1426
      %1556 = vst.msk [vmem:[%s208 + $0x170] sm:$0xf] %vm1463, %v1427
      %1557 = vst.msk [vmem:[%s208 + $0x174] sm:$0xf] %vm1463, %v1428
      %1558 = vst.msk [vmem:[%s208 + $0x178] sm:$0xf] %vm1463, %v1429
      %1559 = vst.msk [vmem:[%s208 + $0x17c] sm:$0xf] %vm1463, %v1430
      %1560 = vst.msk [vmem:[%s208 + $0x180] sm:$0xf] %vm1463, %v1431
      %1561 = vst.msk [vmem:[%s208 + $0x184] sm:$0xf] %vm1463, %v1432
      %1562 = vst.msk [vmem:[%s208 + $0x188] sm:$0xf] %vm1463, %v1433
      %1563 = vst.msk [vmem:[%s208 + $0x18c] sm:$0xf] %vm1463, %v1434
      %1564 = vst.msk [vmem:[%s208 + $0x190] sm:$0xf] %vm1463, %v1435
      %1565 = vst.msk [vmem:[%s208 + $0x194] sm:$0xf] %vm1463, %v1436
      %1566 = vst.msk [vmem:[%s208 + $0x198] sm:$0xf] %vm1463, %v1437
      %1567 = vst.msk [vmem:[%s208 + $0x19c] sm:$0xf] %vm1463, %v1438
      %1568 = vst.msk [vmem:[%s208 + $0x1a0] sm:$0xf] %vm1463, %v1439
      %1569 = vst.msk [vmem:[%s208 + $0x1a4] sm:$0xf] %vm1463, %v1440
      %1570 = vst.msk [vmem:[%s208 + $0x1a8] sm:$0xf] %vm1463, %v1441
      %1571 = vst.msk [vmem:[%s208 + $0x1ac] sm:$0xf] %vm1463, %v1442
      %1572 = vst.msk [vmem:[%s208 + $0x1b0] sm:$0xf] %vm1463, %v1443
      %1573 = vst.msk [vmem:[%s208 + $0x1b4] sm:$0xf] %vm1463, %v1444
      %1574 = vst.msk [vmem:[%s208 + $0x1b8] sm:$0xf] %vm1463, %v1445
      %1575 = vst.msk [vmem:[%s208 + $0x1bc] sm:$0xf] %vm1463, %v1446
      %1576 = vst.msk [vmem:[%s208 + $0x1c0] sm:$0xf] %vm1463, %v1447
      %1577 = vst.msk [vmem:[%s208 + $0x1c4] sm:$0xf] %vm1463, %v1448
      %1578 = vst.msk [vmem:[%s208 + $0x1c8] sm:$0xf] %vm1463, %v1449
      %1579 = vst.msk [vmem:[%s208 + $0x1cc] sm:$0xf] %vm1463, %v1450
      %1580 = vst.msk [vmem:[%s208 + $0x1d0] sm:$0xf] %vm1463, %v1451
      %1581 = vst.msk [vmem:[%s208 + $0x1d4] sm:$0xf] %vm1463, %v1452
      %1582 = vst.msk [vmem:[%s208 + $0x1d8] sm:$0xf] %vm1463, %v1453
      %1583 = vst.msk [vmem:[%s208 + $0x1dc] sm:$0xf] %vm1463, %v1454
      %1584 = vst.msk [vmem:[%s208 + $0x1e0] sm:$0xf] %vm1463, %v1455
      %1585 = vst.msk [vmem:[%s208 + $0x1e4] sm:$0xf] %vm1463, %v1456
      %1586 = vst.msk [vmem:[%s208 + $0x1e8] sm:$0xf] %vm1463, %v1457
      %1587 = vst.msk [vmem:[%s208 + $0x1ec] sm:$0xf] %vm1463, %v1458
      %1588 = vst.msk [vmem:[%s208 + $0x1f0] sm:$0xf] %vm1463, %v1459
      %1589 = vst.msk [vmem:[%s208 + $0x1f4] sm:$0xf] %vm1463, %v1460
      %1590 = vst.msk [vmem:[%s208 + $0x1f8] sm:$0xf] %vm1463, %v1461
      %1591 = vst.msk [vmem:[%s208 + $0x1fc] sm:$0xf] %vm1463, %v1462
      %s1592 = smul.u32 128, %s19
      %p1593 = scmp.lt.s32.totalorder %s18, 1
      %s1594 = scalar_select %p1593, %s18, 1
      %p1595 = scmp.lt.s32.totalorder %s1592, 127
      %s1596 = scalar_select %p1595, %s1592, 127
      %s1597 = smul.addr %s1594, 128
      %s1598 = sadd.s32 %s1596, %s1597
      %s1599 = smul.addr %s1598, 4
      %s1600 = scalar_lea.vmem %s3, %s1599
      // Predicated region
      $region33: #{tpu_custom_call.1} parent=31 // pred_check
        %p1601 = pneg %p116
      $region34: #{tpu_custom_call.1} parent=31 // pred_check_branch
        %1603 = sbr.rel (%p1601) target = $region36
      $region35: #{tpu_custom_call.1} parent=31 // pred_region
        %s1604 = smul.u32 128, %s19
      $region36: #{tpu_custom_call.1} parent=31 // pred_fallthru
        _
    $region32: #{tpu_custom_call.1} parent=5 // pred_fallthru
      _
    %p1605 = scmp.le.s32.totalorder 2, %s9
    // Predicated region
    $region37: #{tpu_custom_call.1} parent=5 // pred_check
      %p1606 = pneg %p1605
    $region38: #{tpu_custom_call.1} parent=5 // pred_check_branch
      %1608 = sbr.rel (%p1606) target = $region40
    $region39: #{tpu_custom_call.1} parent=5 // pred_region
      %s1609 = ssub.s32 %s9, 2
      // Predicated region
      $region41: #{tpu_custom_call.1} parent=39 // pred_check
        %p1610 = pneg %p122
      $region42: #{tpu_custom_call.1} parent=39 // pred_check_branch
        %1612 = sbr.rel (%p1610) target = $region44
      $region43: #{tpu_custom_call.1} parent=39 // pred_region
        %s1613 = smul.u32 128, %s21
        %p1614 = scmp.lt.s32.totalorder %s20, 1
        %s1615 = scalar_select %p1614, %s20, 1
        %p1616 = scmp.lt.s32.totalorder %s1613, 127
        %s1617 = scalar_select %p1616, %s1613, 127
        %s1618 = smul.addr %s1615, 128
        %s1619 = sadd.s32 %s1617, %s1618
        %s1620 = smul.addr %s1619, 4
        %s1621 = scalar_lea.vmem %s3, %s1620
      $region44: #{tpu_custom_call.1} parent=39 // pred_fallthru
        _
    $region40: #{tpu_custom_call.1} parent=5 // pred_fallthru
      _
  $region6: #{tpu_custom_call.1} parent=0 // loop_footer
    %s13 = sadd.s32 1, %s9
  $region7: #{tpu_custom_call.1} parent=0 // loop_footer_branch
    %8 = sbr.rel target = $region3
  $region8: #{tpu_custom_call.1} parent=0 // loop_exit
    _

</llo_original>
